<compile_context>
chip_gen: v6e
topology: v6e:2x2x1
jax: 0.10.0
libtpu: 0.0.40
codegen_flags: <defaults>
</compile_context>

<pallas_src>
import functools

import jax
import jax.numpy as jnp
from jax.experimental import pallas as pl
from jax.experimental.pallas import tpu as pltpu


_CINS = (3, 12, 24, 48)    # per-layer input channels (layer 1 folded to 3)
_COUTS = (12, 24, 48, 24)  # per-layer output channels


# ---------------------------------------------------------------------------
# Fused kernel: one (encoder, batch-tile) grid step runs all 4 conv+ReLU layers
# ---------------------------------------------------------------------------
def _make_kernel(bt, h0, w0):
    hs = (h0, h0 // 2, h0 // 4, h0 // 8)   # input H per layer
    ws = (w0, w0 // 2, w0 // 4, w0 // 8)   # input W per layer

    def kernel(x_ref, p1, b1, p2, b2, p3, b3, p4, b4, o_ref,
               pad2, pad3, pad4, c1, c2, c3, c4):
        p_refs = (p1, p2, p3, p4)
        bias_refs = (b1, b2, b3, b4)
        col_refs = (c1, c2, c3, c4)
        next_pad = (pad2, pad3, pad4, None)

        # Width-pad rows of the staging activations must read as zero.
        pad2[...] = jnp.zeros_like(pad2)
        pad3[...] = jnp.zeros_like(pad3)
        pad4[...] = jnp.zeros_like(pad4)

        src = x_ref                          # f32, rows (b, w_pad), cols (ci, h)
        for li in range(4):
            hi, wi, cin = hs[li], ws[li], _CINS[li]
            wo = wi // 2
            ch = cin * hi
            cols = col_refs[li]
            # Stage the 4 taps of every sample into ONE long-K bf16 operand:
            #   cols[(b, j), (kw, ci, h)] = act[b, ci, h, 2*j + kw - 1]
            # Strided sublane reads; the width zero-pad is already in `src`.
            for b in range(bt):
                base = b * (wi + 2)
                for kw in range(4):
                    cols[b * wo:(b + 1) * wo, kw * ch:(kw + 1) * ch] = (
                        src[pl.ds(base + kw, wo, stride=2), :]
                        .astype(jnp.bfloat16))
            # Single MXU matmul per layer, bf16 operands, f32 accumulation.
            acc = jnp.dot(cols[...], p_refs[li][...],
                          preferred_element_type=jnp.float32)
            act = jnp.maximum(acc + bias_refs[li][...], 0.0)   # f32 epilogue
            if li < 3:
                # Scatter per-sample row blocks into the next width-padded slab.
                dst = next_pad[li]
                for b in range(bt):
                    dst[b * (wo + 2) + 1:b * (wo + 2) + 1 + wo, :] = (
                        act[b * wo:(b + 1) * wo, :])
                src = dst
            else:
                o_ref[...] = act             # one (bt*Wo4, 24*Ho4) store

    return kernel


# ---------------------------------------------------------------------------
# Constant-operand construction (runs once, outside the kernel)
# ---------------------------------------------------------------------------
def _fold_weight_T(w_oihw, h_in):
    """Fold the row taps (kh) and channel contraction into a transposed op.

    Pt[kw*Cin*H + ci*H + h, co*Ho + i] = w[co, ci, h - 2*i + 1, kw]
    (0 when kh = h - 2*i + 1 is outside [0, 4): this is the row zero-pad).
    """
    cout, cin, _, _ = w_oihw.shape
    ho = h_in // 2
    i = jnp.arange(ho)[None, :]
    h = jnp.arange(h_in)[:, None]
    kh = h - 2 * i + 1                                    # (H, Ho)
    valid = (kh >= 0) & (kh <= 3)
    wg = w_oihw[:, :, jnp.clip(kh, 0, 3), :]              # (Cout, Cin, H, Ho, 4)
    wg = jnp.where(valid[None, None, :, :, None], wg, 0.0)
    pt = jnp.transpose(wg, (4, 1, 2, 0, 3)).reshape(4 * cin * h_in, cout * ho)
    return pt.astype(jnp.bfloat16)


def prepare_operands(params_l, params_ab, H):
    """Per-layer folded weight operators and bias rows, stacked over encoders."""
    # Fold the channel split of the first conv into zero weight rows so both
    # encoders consume the SAME 3-channel input block (L at ch0, ab at ch1:3).
    w0_l, b0_l = params_l[0]
    w0_ab, b0_ab = params_ab[0]
    w0_l = jnp.concatenate(
        [w0_l, jnp.zeros((w0_l.shape[0], 2, 4, 4), w0_l.dtype)], axis=1)
    w0_ab = jnp.concatenate(
        [jnp.zeros((w0_ab.shape[0], 1, 4, 4), w0_ab.dtype), w0_ab], axis=1)
    enc_l = [(w0_l, b0_l)] + list(params_l[1:])
    enc_ab = [(w0_ab, b0_ab)] + list(params_ab[1:])

    pts, bias_rows = [], []
    h = H
    for li in range(4):
        ho = h // 2
        pts.append(jnp.stack([_fold_weight_T(enc_l[li][0], h),
                              _fold_weight_T(enc_ab[li][0], h)], axis=0))
        bias_rows.append(jnp.stack(
            [jnp.repeat(enc_l[li][1], ho)[None, :],
             jnp.repeat(enc_ab[li][1], ho)[None, :]],
            axis=0).astype(jnp.float32))                  # (2, 1, Cout*Ho)
        h = ho
    return pts, bias_rows


# ---------------------------------------------------------------------------
# Fused forward: one pallas_call for both encoders, all layers
# ---------------------------------------------------------------------------
def encoder_cmc_forward(pts, bias_rows, x, *, batch_tile=None):
    B, C, H, W = x.shape
    assert C == 3 and H % 16 == 0 and W % 16 == 0, (C, H, W)
    bt = B if batch_tile is None else batch_tile
    assert B % bt == 0
    T = B // bt
    ho4, wo4 = H // 16, W // 16
    m4 = 24 * ho4

    # Single shared input: rows (b, w_pad) with one zero image column on each
    # side of w, columns (ci, h).  No per-encoder duplication, no zero channel.
    xt = jnp.transpose(x, (0, 3, 1, 2)).reshape(B, W, C * H)
    xt = jnp.pad(xt, ((0, 0), (1, 1), (0, 0)))
    xt = xt.reshape(T, bt * (W + 2), C * H).astype(jnp.float32)

    in_specs = [pl.BlockSpec((None, bt * (W + 2), C * H),
                             lambda e, t: (t, 0, 0))]
    inputs = [xt]
    for li in range(4):
        k, m = pts[li].shape[1], pts[li].shape[2]
        in_specs.append(pl.BlockSpec((None, k, m), lambda e, t: (e, 0, 0)))
        in_specs.append(pl.BlockSpec((None, 1, m), lambda e, t: (e, 0, 0)))
        inputs += [pts[li], bias_rows[li]]

    hs = (H, H // 2, H // 4, H // 8)
    ws = (W, W // 2, W // 4, W // 8)
    scratch_shapes = []
    for li in (1, 2, 3):   # width-padded f32 input activations of layers 2..4
        scratch_shapes.append(
            pltpu.VMEM((bt * (ws[li] + 2), _CINS[li] * hs[li]), jnp.float32))
    for li in range(4):    # long-K bf16 staging operand, one per layer
        scratch_shapes.append(
            pltpu.VMEM((bt * (ws[li] // 2), 4 * _CINS[li] * hs[li]),
                       jnp.bfloat16))

    # Explicit VMEM budget: 2x-buffered blocks + scratch + headroom, floored
    # at 16 MiB and capped at v7x's 64 MiB physical VMEM.
    blk = bt * (W + 2) * C * H * 4 + bt * wo4 * m4 * 4
    for li in range(4):
        blk += pts[li].shape[1] * pts[li].shape[2] * 2 + pts[li].shape[2] * 4
    scr = sum(bt * (ws[li] + 2) * _CINS[li] * hs[li] * 4 for li in (1, 2, 3))
    scr += sum(bt * (ws[li] // 2) * 4 * _CINS[li] * hs[li] * 2
               for li in range(4))
    vmem_limit = int(min(64 << 20, max(16 << 20, 2 * blk + scr + (2 << 20))))

    out = pl.pallas_call(
        _make_kernel(bt, H, W),
        out_shape=jax.ShapeDtypeStruct((2, T, bt * wo4, m4), jnp.float32),
        grid=(2, T),                                   # (encoder, batch tile)
        in_specs=in_specs,
        out_specs=pl.BlockSpec((None, None, bt * wo4, m4),
                               lambda e, t: (e, t, 0, 0)),
        scratch_shapes=scratch_shapes,
        compiler_params=pltpu.CompilerParams(
            dimension_semantics=("parallel", "parallel"),
            vmem_limit_bytes=vmem_limit),
    )(*inputs)

    # out[e, t, b*Wo4 + j, co*Ho4 + i] -> per-sample NCHW flatten (== torch).
    o = out.reshape(2, T, bt, wo4, 24, ho4)
    o = jnp.transpose(o, (0, 1, 2, 4, 5, 3)).reshape(2, B, 24 * ho4 * wo4)
    return o[0], o[1]


# ---------------------------------------------------------------------------
# Parameter construction (deterministic, PyTorch-default-like init)
# ---------------------------------------------------------------------------
def init_encoder_params(key, in_channels):
    chans = [in_channels, 12, 24, 48, 24]
    params = []
    for i in range(4):
        cin, cout = chans[i], chans[i + 1]
        key, k_w, k_b = jax.random.split(key, 3)
        bound = 1.0 / jnp.sqrt(cin * 4 * 4)
        w = jax.random.uniform(k_w, (cout, cin, 4, 4), jnp.float32, -bound, bound)
        b = jax.random.uniform(k_b, (cout,), jnp.float32, -bound, bound)
        params.append((w, b))
    return params


# ---------------------------------------------------------------------------
# Plain-JAX reference (in-script numerical sanity check)
# ---------------------------------------------------------------------------
def _reference_forward(params, x_nchw):
    h = x_nchw
    for w, b in params:
        h = jax.lax.conv_general_dilated(
            h, w, window_strides=(2, 2), padding=((1, 1), (1, 1)),
            dimension_numbers=("NCHW", "OIHW", "NCHW"))
        h = jnp.maximum(h + b[None, :, None, None], 0.0)
    return h.reshape(h.shape[0], -1)


if __name__ == "__main__":
    key = jax.random.PRNGKey(0)
    k_x, k_l, k_ab = jax.random.split(key, 3)

    # Small shapes: batch=2, 3 channels (L + ab), 16x16 spatial
    # (16 / 2^4 = 1, so each encoder produces a (B, 24) feature).
    B, H, W = 2, 16, 16
    x = jax.random.normal(k_x, (B, 3, H, W), jnp.float32)

    params_l = init_encoder_params(k_l, in_channels=1)
    params_ab = init_encoder_params(k_ab, in_channels=2)

    pts, bias_rows = prepare_operands(params_l, params_ab, H)
    fwd = jax.jit(functools.partial(encoder_cmc_forward, pts, bias_rows))

    feat_l, feat_ab = fwd(x)
    jax.block_until_ready((feat_l, feat_ab))

    assert feat_l.shape == (B, 24), feat_l.shape
    assert feat_ab.shape == (B, 24), feat_ab.shape

    # Sanity check vs. the plain-JAX conv reference (bf16 operands / f32 acc).
    ref_l = _reference_forward(params_l, x[:, 0:1])
    ref_ab = _reference_forward(params_ab, x[:, 1:3])
    assert jnp.allclose(feat_l, ref_l, atol=5e-2, rtol=5e-2), \
        float(jnp.max(jnp.abs(feat_l - ref_l)))
    assert jnp.allclose(feat_ab, ref_ab, atol=5e-2, rtol=5e-2), \
        float(jnp.max(jnp.abs(feat_ab - ref_ab)))

    print("KERNEL_OK")
</pallas_src>

<mosaic_0001>
module attributes {stable_mosaic.version = 11 : i64} {
  func.func @kernel(%arg0: i32, %arg1: i32, %arg2: memref<1x36x48xf32, #tpu.memory_space<vmem>>, %arg3: memref<1x192x96xbf16, #tpu.memory_space<vmem>>, %arg4: memref<1x1x96xf32, #tpu.memory_space<vmem>>, %arg5: memref<1x384x96xbf16, #tpu.memory_space<vmem>>, %arg6: memref<1x1x96xf32, #tpu.memory_space<vmem>>, %arg7: memref<1x384x96xbf16, #tpu.memory_space<vmem>>, %arg8: memref<1x1x96xf32, #tpu.memory_space<vmem>>, %arg9: memref<1x384x24xbf16, #tpu.memory_space<vmem>>, %arg10: memref<1x1x24xf32, #tpu.memory_space<vmem>>, %arg11: memref<1x1x2x24xf32, #tpu.memory_space<vmem>>, %arg12: memref<20x96xf32, #tpu.memory_space<vmem>>, %arg13: memref<12x96xf32, #tpu.memory_space<vmem>>, %arg14: memref<8x96xf32, #tpu.memory_space<vmem>>, %arg15: memref<16x192xbf16, #tpu.memory_space<vmem>>, %arg16: memref<8x384xbf16, #tpu.memory_space<vmem>>, %arg17: memref<4x384xbf16, #tpu.memory_space<vmem>>, %arg18: memref<2x384xbf16, #tpu.memory_space<vmem>>) attributes {dimension_semantics = [#tpu.dimension_semantics<parallel>, #tpu.dimension_semantics<parallel>], iteration_bounds = array<i64: 2, 1>, scalar_prefetch = 0 : i64, scratch_operands = 7 : i64, tpu.core_type = #tpu.core_type<tc>, window_params = [{transform_indices = @transform_0, window_bounds = array<i64: 1, 36, 48>}, {transform_indices = @transform_1, window_bounds = array<i64: 1, 192, 96>}, {transform_indices = @transform_2, window_bounds = array<i64: 1, 1, 96>}, {transform_indices = @transform_3, window_bounds = array<i64: 1, 384, 96>}, {transform_indices = @transform_4, window_bounds = array<i64: 1, 1, 96>}, {transform_indices = @transform_5, window_bounds = array<i64: 1, 384, 96>}, {transform_indices = @transform_6, window_bounds = array<i64: 1, 1, 96>}, {transform_indices = @transform_7, window_bounds = array<i64: 1, 384, 24>}, {transform_indices = @transform_8, window_bounds = array<i64: 1, 1, 24>}, {transform_indices = @transform_9, window_bounds = array<i64: 1, 1, 2, 24>}]} {
    %cst = arith.constant 0.000000e+00 : f32
    %0 = vector.broadcast %cst : f32 to vector<20x96xf32>
    %c0 = arith.constant 0 : index
    %c0_0 = arith.constant 0 : index
    %1 = vector.load %arg12[%c0, %c0_0] : memref<20x96xf32, #tpu.memory_space<vmem>>, vector<20x96xf32>
    tpu.vector_store %arg12[%c0, %c0_0], %0 {strides = array<i32>} : memref<20x96xf32, #tpu.memory_space<vmem>>, vector<20x96xf32>,
    %cst_1 = arith.constant 0.000000e+00 : f32
    %2 = vector.broadcast %cst_1 : f32 to vector<12x96xf32>
    %c0_2 = arith.constant 0 : index
    %c0_3 = arith.constant 0 : index
    %3 = vector.load %arg13[%c0_2, %c0_3] : memref<12x96xf32, #tpu.memory_space<vmem>>, vector<12x96xf32>
    tpu.vector_store %arg13[%c0_2, %c0_3], %2 {strides = array<i32>} : memref<12x96xf32, #tpu.memory_space<vmem>>, vector<12x96xf32>,
    %cst_4 = arith.constant 0.000000e+00 : f32
    %4 = vector.broadcast %cst_4 : f32 to vector<8x96xf32>
    %c0_5 = arith.constant 0 : index
    %c0_6 = arith.constant 0 : index
    %5 = vector.load %arg14[%c0_5, %c0_6] : memref<8x96xf32, #tpu.memory_space<vmem>>, vector<8x96xf32>
    tpu.vector_store %arg14[%c0_5, %c0_6], %4 {strides = array<i32>} : memref<8x96xf32, #tpu.memory_space<vmem>>, vector<8x96xf32>,
    %c0_7 = arith.constant 0 : index
    %c0_8 = arith.constant 0 : index
    %c0_9 = arith.constant 0 : index
    %6 = tpu.strided_load %arg2[%c0_7, %c0_8, %c0_9] {strides = array<i32: 1, 2, 1>} : memref<1x36x48xf32, #tpu.memory_space<vmem>>, vector<1x8x48xf32>
    %7 = vector.shape_cast %6 : vector<1x8x48xf32> to vector<8x48xf32>
    %8 = arith.truncf %7 : vector<8x48xf32> to vector<8x48xbf16>
    %c0_10 = arith.constant 0 : index
    %c0_11 = arith.constant 0 : index
    %9 = vector.load %arg15[%c0_10, %c0_11] : memref<16x192xbf16, #tpu.memory_space<vmem>>, vector<8x48xbf16>
    tpu.vector_store %arg15[%c0_10, %c0_11], %8 {strides = array<i32>} : memref<16x192xbf16, #tpu.memory_space<vmem>>, vector<8x48xbf16>,
    %c0_12 = arith.constant 0 : index
    %c1 = arith.constant 1 : index
    %c0_13 = arith.constant 0 : index
    %10 = tpu.strided_load %arg2[%c0_12, %c1, %c0_13] {strides = array<i32: 1, 2, 1>} : memref<1x36x48xf32, #tpu.memory_space<vmem>>, vector<1x8x48xf32>
    %11 = vector.shape_cast %10 : vector<1x8x48xf32> to vector<8x48xf32>
    %12 = arith.truncf %11 : vector<8x48xf32> to vector<8x48xbf16>
    %c0_14 = arith.constant 0 : index
    %c48 = arith.constant 48 : index
    %13 = vector.load %arg15[%c0_14, %c48] : memref<16x192xbf16, #tpu.memory_space<vmem>>, vector<8x48xbf16>
    tpu.vector_store %arg15[%c0_14, %c48], %12 {strides = array<i32>} : memref<16x192xbf16, #tpu.memory_space<vmem>>, vector<8x48xbf16>,
    %c0_15 = arith.constant 0 : index
    %c2 = arith.constant 2 : index
    %c0_16 = arith.constant 0 : index
    %14 = tpu.strided_load %arg2[%c0_15, %c2, %c0_16] {strides = array<i32: 1, 2, 1>} : memref<1x36x48xf32, #tpu.memory_space<vmem>>, vector<1x8x48xf32>
    %15 = vector.shape_cast %14 : vector<1x8x48xf32> to vector<8x48xf32>
    %16 = arith.truncf %15 : vector<8x48xf32> to vector<8x48xbf16>
    %c0_17 = arith.constant 0 : index
    %c96 = arith.constant 96 : index
    %17 = vector.load %arg15[%c0_17, %c96] : memref<16x192xbf16, #tpu.memory_space<vmem>>, vector<8x48xbf16>
    tpu.vector_store %arg15[%c0_17, %c96], %16 {strides = array<i32>} : memref<16x192xbf16, #tpu.memory_space<vmem>>, vector<8x48xbf16>,
    %c0_18 = arith.constant 0 : index
    %c3 = arith.constant 3 : index
    %c0_19 = arith.constant 0 : index
    %18 = tpu.strided_load %arg2[%c0_18, %c3, %c0_19] {strides = array<i32: 1, 2, 1>} : memref<1x36x48xf32, #tpu.memory_space<vmem>>, vector<1x8x48xf32>
    %19 = vector.shape_cast %18 : vector<1x8x48xf32> to vector<8x48xf32>
    %20 = arith.truncf %19 : vector<8x48xf32> to vector<8x48xbf16>
    %c0_20 = arith.constant 0 : index
    %c144 = arith.constant 144 : index
    %21 = vector.load %arg15[%c0_20, %c144] : memref<16x192xbf16, #tpu.memory_space<vmem>>, vector<8x48xbf16>
    tpu.vector_store %arg15[%c0_20, %c144], %20 {strides = array<i32>} : memref<16x192xbf16, #tpu.memory_space<vmem>>, vector<8x48xbf16>,
    %c0_21 = arith.constant 0 : index
    %c18 = arith.constant 18 : index
    %c0_22 = arith.constant 0 : index
    %22 = tpu.strided_load %arg2[%c0_21, %c18, %c0_22] {strides = array<i32: 1, 2, 1>} : memref<1x36x48xf32, #tpu.memory_space<vmem>>, vector<1x8x48xf32>
    %23 = vector.shape_cast %22 : vector<1x8x48xf32> to vector<8x48xf32>
    %24 = arith.truncf %23 : vector<8x48xf32> to vector<8x48xbf16>
    %c8 = arith.constant 8 : index
    %c0_23 = arith.constant 0 : index
    %25 = vector.load %arg15[%c8, %c0_23] : memref<16x192xbf16, #tpu.memory_space<vmem>>, vector<8x48xbf16>
    tpu.vector_store %arg15[%c8, %c0_23], %24 {strides = array<i32>} : memref<16x192xbf16, #tpu.memory_space<vmem>>, vector<8x48xbf16>,
    %c0_24 = arith.constant 0 : index
    %c19 = arith.constant 19 : index
    %c0_25 = arith.constant 0 : index
    %26 = tpu.strided_load %arg2[%c0_24, %c19, %c0_25] {strides = array<i32: 1, 2, 1>} : memref<1x36x48xf32, #tpu.memory_space<vmem>>, vector<1x8x48xf32>
    %27 = vector.shape_cast %26 : vector<1x8x48xf32> to vector<8x48xf32>
    %28 = arith.truncf %27 : vector<8x48xf32> to vector<8x48xbf16>
    %c8_26 = arith.constant 8 : index
    %c48_27 = arith.constant 48 : index
    %29 = vector.load %arg15[%c8_26, %c48_27] : memref<16x192xbf16, #tpu.memory_space<vmem>>, vector<8x48xbf16>
    tpu.vector_store %arg15[%c8_26, %c48_27], %28 {strides = array<i32>} : memref<16x192xbf16, #tpu.memory_space<vmem>>, vector<8x48xbf16>,
    %c0_28 = arith.constant 0 : index
    %c20 = arith.constant 20 : index
    %c0_29 = arith.constant 0 : index
    %30 = tpu.strided_load %arg2[%c0_28, %c20, %c0_29] {strides = array<i32: 1, 2, 1>} : memref<1x36x48xf32, #tpu.memory_space<vmem>>, vector<1x8x48xf32>
    %31 = vector.shape_cast %30 : vector<1x8x48xf32> to vector<8x48xf32>
    %32 = arith.truncf %31 : vector<8x48xf32> to vector<8x48xbf16>
    %c8_30 = arith.constant 8 : index
    %c96_31 = arith.constant 96 : index
    %33 = vector.load %arg15[%c8_30, %c96_31] : memref<16x192xbf16, #tpu.memory_space<vmem>>, vector<8x48xbf16>
    tpu.vector_store %arg15[%c8_30, %c96_31], %32 {strides = array<i32>} : memref<16x192xbf16, #tpu.memory_space<vmem>>, vector<8x48xbf16>,
    %c0_32 = arith.constant 0 : index
    %c21 = arith.constant 21 : index
    %c0_33 = arith.constant 0 : index
    %34 = tpu.strided_load %arg2[%c0_32, %c21, %c0_33] {strides = array<i32: 1, 2, 1>} : memref<1x36x48xf32, #tpu.memory_space<vmem>>, vector<1x8x48xf32>
    %35 = vector.shape_cast %34 : vector<1x8x48xf32> to vector<8x48xf32>
    %36 = arith.truncf %35 : vector<8x48xf32> to vector<8x48xbf16>
    %c8_34 = arith.constant 8 : index
    %c144_35 = arith.constant 144 : index
    %37 = vector.load %arg15[%c8_34, %c144_35] : memref<16x192xbf16, #tpu.memory_space<vmem>>, vector<8x48xbf16>
    tpu.vector_store %arg15[%c8_34, %c144_35], %36 {strides = array<i32>} : memref<16x192xbf16, #tpu.memory_space<vmem>>, vector<8x48xbf16>,
    %c0_36 = arith.constant 0 : index
    %c0_37 = arith.constant 0 : index
    %38 = vector.load %arg15[%c0_36, %c0_37] : memref<16x192xbf16, #tpu.memory_space<vmem>>, vector<16x192xbf16>
    %c0_38 = arith.constant 0 : index
    %c0_39 = arith.constant 0 : index
    %c0_40 = arith.constant 0 : index
    %39 = vector.load %arg3[%c0_38, %c0_39, %c0_40] : memref<1x192x96xbf16, #tpu.memory_space<vmem>>, vector<1x192x96xbf16>
    %40 = vector.shape_cast %39 : vector<1x192x96xbf16> to vector<192x96xbf16>
    %cst_41 = arith.constant dense<0.000000e+00> : vector<16x96xf32>
    %41 = tpu.matmul %38, %40, %cst_41 {dimension_numbers = #tpu.dot_dimension_numbers<[1], [0], [0], [1], [0, 0, 1, 1], [], []>} : vector<16x192xbf16>, vector<192x96xbf16>, vector<16x96xf32> -> vector<16x96xf32>
    %c0_42 = arith.constant 0 : index
    %c0_43 = arith.constant 0 : index
    %c0_44 = arith.constant 0 : index
    %42 = vector.load %arg4[%c0_42, %c0_43, %c0_44] : memref<1x1x96xf32, #tpu.memory_space<vmem>>, vector<1x1x96xf32>
    %43 = vector.shape_cast %42 : vector<1x1x96xf32> to vector<1x96xf32>
    %44 = vector.broadcast %43 : vector<1x96xf32> to vector<16x96xf32>
    %45 = arith.addf %41, %44 : vector<16x96xf32>
    %cst_45 = arith.constant 0.000000e+00 : f32
    %46 = vector.broadcast %cst_45 : f32 to vector<16x96xf32>
    %47 = arith.maximumf %45, %46 : vector<16x96xf32>
    %48 = vector.extract_strided_slice %47 {offsets = [0, 0], sizes = [8, 96], strides = [1, 1]} : vector<16x96xf32> to vector<8x96xf32>
    %c1_46 = arith.constant 1 : index
    %c0_47 = arith.constant 0 : index
    %49 = vector.load %arg12[%c1_46, %c0_47] : memref<20x96xf32, #tpu.memory_space<vmem>>, vector<8x96xf32>
    tpu.vector_store %arg12[%c1_46, %c0_47], %48 {strides = array<i32>} : memref<20x96xf32, #tpu.memory_space<vmem>>, vector<8x96xf32>,
    %50 = vector.extract_strided_slice %47 {offsets = [8, 0], sizes = [8, 96], strides = [1, 1]} : vector<16x96xf32> to vector<8x96xf32>
    %c11 = arith.constant 11 : index
    %c0_48 = arith.constant 0 : index
    %51 = vector.load %arg12[%c11, %c0_48] : memref<20x96xf32, #tpu.memory_space<vmem>>, vector<8x96xf32>
    tpu.vector_store %arg12[%c11, %c0_48], %50 {strides = array<i32>} : memref<20x96xf32, #tpu.memory_space<vmem>>, vector<8x96xf32>,
    %c0_49 = arith.constant 0 : index
    %c0_50 = arith.constant 0 : index
    %52 = tpu.strided_load %arg12[%c0_49, %c0_50] {strides = array<i32: 2, 1>} : memref<20x96xf32, #tpu.memory_space<vmem>>, vector<4x96xf32>
    %53 = arith.truncf %52 : vector<4x96xf32> to vector<4x96xbf16>
    %c0_51 = arith.constant 0 : index
    %c0_52 = arith.constant 0 : index
    %54 = vector.load %arg16[%c0_51, %c0_52] : memref<8x384xbf16, #tpu.memory_space<vmem>>, vector<4x96xbf16>
    tpu.vector_store %arg16[%c0_51, %c0_52], %53 {strides = array<i32>} : memref<8x384xbf16, #tpu.memory_space<vmem>>, vector<4x96xbf16>,
    %c1_53 = arith.constant 1 : index
    %c0_54 = arith.constant 0 : index
    %55 = tpu.strided_load %arg12[%c1_53, %c0_54] {strides = array<i32: 2, 1>} : memref<20x96xf32, #tpu.memory_space<vmem>>, vector<4x96xf32>
    %56 = arith.truncf %55 : vector<4x96xf32> to vector<4x96xbf16>
    %c0_55 = arith.constant 0 : index
    %c96_56 = arith.constant 96 : index
    %57 = vector.load %arg16[%c0_55, %c96_56] : memref<8x384xbf16, #tpu.memory_space<vmem>>, vector<4x96xbf16>
    tpu.vector_store %arg16[%c0_55, %c96_56], %56 {strides = array<i32>} : memref<8x384xbf16, #tpu.memory_space<vmem>>, vector<4x96xbf16>,
    %c2_57 = arith.constant 2 : index
    %c0_58 = arith.constant 0 : index
    %58 = tpu.strided_load %arg12[%c2_57, %c0_58] {strides = array<i32: 2, 1>} : memref<20x96xf32, #tpu.memory_space<vmem>>, vector<4x96xf32>
    %59 = arith.truncf %58 : vector<4x96xf32> to vector<4x96xbf16>
    %c0_59 = arith.constant 0 : index
    %c192 = arith.constant 192 : index
    %60 = vector.load %arg16[%c0_59, %c192] : memref<8x384xbf16, #tpu.memory_space<vmem>>, vector<4x96xbf16>
    tpu.vector_store %arg16[%c0_59, %c192], %59 {strides = array<i32>} : memref<8x384xbf16, #tpu.memory_space<vmem>>, vector<4x96xbf16>,
    %c3_60 = arith.constant 3 : index
    %c0_61 = arith.constant 0 : index
    %61 = tpu.strided_load %arg12[%c3_60, %c0_61] {strides = array<i32: 2, 1>} : memref<20x96xf32, #tpu.memory_space<vmem>>, vector<4x96xf32>
    %62 = arith.truncf %61 : vector<4x96xf32> to vector<4x96xbf16>
    %c0_62 = arith.constant 0 : index
    %c288 = arith.constant 288 : index
    %63 = vector.load %arg16[%c0_62, %c288] : memref<8x384xbf16, #tpu.memory_space<vmem>>, vector<4x96xbf16>
    tpu.vector_store %arg16[%c0_62, %c288], %62 {strides = array<i32>} : memref<8x384xbf16, #tpu.memory_space<vmem>>, vector<4x96xbf16>,
    %c10 = arith.constant 10 : index
    %c0_63 = arith.constant 0 : index
    %64 = tpu.strided_load %arg12[%c10, %c0_63] {strides = array<i32: 2, 1>} : memref<20x96xf32, #tpu.memory_space<vmem>>, vector<4x96xf32>
    %65 = arith.truncf %64 : vector<4x96xf32> to vector<4x96xbf16>
    %c4 = arith.constant 4 : index
    %c0_64 = arith.constant 0 : index
    %66 = vector.load %arg16[%c4, %c0_64] : memref<8x384xbf16, #tpu.memory_space<vmem>>, vector<4x96xbf16>
    tpu.vector_store %arg16[%c4, %c0_64], %65 {strides = array<i32>} : memref<8x384xbf16, #tpu.memory_space<vmem>>, vector<4x96xbf16>,
    %c11_65 = arith.constant 11 : index
    %c0_66 = arith.constant 0 : index
    %67 = tpu.strided_load %arg12[%c11_65, %c0_66] {strides = array<i32: 2, 1>} : memref<20x96xf32, #tpu.memory_space<vmem>>, vector<4x96xf32>
    %68 = arith.truncf %67 : vector<4x96xf32> to vector<4x96xbf16>
    %c4_67 = arith.constant 4 : index
    %c96_68 = arith.constant 96 : index
    %69 = vector.load %arg16[%c4_67, %c96_68] : memref<8x384xbf16, #tpu.memory_space<vmem>>, vector<4x96xbf16>
    tpu.vector_store %arg16[%c4_67, %c96_68], %68 {strides = array<i32>} : memref<8x384xbf16, #tpu.memory_space<vmem>>, vector<4x96xbf16>,
    %c12 = arith.constant 12 : index
    %c0_69 = arith.constant 0 : index
    %70 = tpu.strided_load %arg12[%c12, %c0_69] {strides = array<i32: 2, 1>} : memref<20x96xf32, #tpu.memory_space<vmem>>, vector<4x96xf32>
    %71 = arith.truncf %70 : vector<4x96xf32> to vector<4x96xbf16>
    %c4_70 = arith.constant 4 : index
    %c192_71 = arith.constant 192 : index
    %72 = vector.load %arg16[%c4_70, %c192_71] : memref<8x384xbf16, #tpu.memory_space<vmem>>, vector<4x96xbf16>
    tpu.vector_store %arg16[%c4_70, %c192_71], %71 {strides = array<i32>} : memref<8x384xbf16, #tpu.memory_space<vmem>>, vector<4x96xbf16>,
    %c13 = arith.constant 13 : index
    %c0_72 = arith.constant 0 : index
    %73 = tpu.strided_load %arg12[%c13, %c0_72] {strides = array<i32: 2, 1>} : memref<20x96xf32, #tpu.memory_space<vmem>>, vector<4x96xf32>
    %74 = arith.truncf %73 : vector<4x96xf32> to vector<4x96xbf16>
    %c4_73 = arith.constant 4 : index
    %c288_74 = arith.constant 288 : index
    %75 = vector.load %arg16[%c4_73, %c288_74] : memref<8x384xbf16, #tpu.memory_space<vmem>>, vector<4x96xbf16>
    tpu.vector_store %arg16[%c4_73, %c288_74], %74 {strides = array<i32>} : memref<8x384xbf16, #tpu.memory_space<vmem>>, vector<4x96xbf16>,
    %c0_75 = arith.constant 0 : index
    %c0_76 = arith.constant 0 : index
    %76 = vector.load %arg16[%c0_75, %c0_76] : memref<8x384xbf16, #tpu.memory_space<vmem>>, vector<8x384xbf16>
    %c0_77 = arith.constant 0 : index
    %c0_78 = arith.constant 0 : index
    %c0_79 = arith.constant 0 : index
    %77 = vector.load %arg5[%c0_77, %c0_78, %c0_79] : memref<1x384x96xbf16, #tpu.memory_space<vmem>>, vector<1x384x96xbf16>
    %78 = vector.shape_cast %77 : vector<1x384x96xbf16> to vector<384x96xbf16>
    %cst_80 = arith.constant dense<0.000000e+00> : vector<8x96xf32>
    %79 = tpu.matmul %76, %78, %cst_80 {dimension_numbers = #tpu.dot_dimension_numbers<[1], [0], [0], [1], [0, 0, 1, 1], [], []>} : vector<8x384xbf16>, vector<384x96xbf16>, vector<8x96xf32> -> vector<8x96xf32>
    %c0_81 = arith.constant 0 : index
    %c0_82 = arith.constant 0 : index
    %c0_83 = arith.constant 0 : index
    %80 = vector.load %arg6[%c0_81, %c0_82, %c0_83] : memref<1x1x96xf32, #tpu.memory_space<vmem>>, vector<1x1x96xf32>
    %81 = vector.shape_cast %80 : vector<1x1x96xf32> to vector<1x96xf32>
    %82 = vector.broadcast %81 : vector<1x96xf32> to vector<8x96xf32>
    %83 = arith.addf %79, %82 : vector<8x96xf32>
    %cst_84 = arith.constant 0.000000e+00 : f32
    %84 = vector.broadcast %cst_84 : f32 to vector<8x96xf32>
    %85 = arith.maximumf %83, %84 : vector<8x96xf32>
    %86 = vector.extract_strided_slice %85 {offsets = [0, 0], sizes = [4, 96], strides = [1, 1]} : vector<8x96xf32> to vector<4x96xf32>
    %c1_85 = arith.constant 1 : index
    %c0_86 = arith.constant 0 : index
    %87 = vector.load %arg13[%c1_85, %c0_86] : memref<12x96xf32, #tpu.memory_space<vmem>>, vector<4x96xf32>
    tpu.vector_store %arg13[%c1_85, %c0_86], %86 {strides = array<i32>} : memref<12x96xf32, #tpu.memory_space<vmem>>, vector<4x96xf32>,
    %88 = vector.extract_strided_slice %85 {offsets = [4, 0], sizes = [4, 96], strides = [1, 1]} : vector<8x96xf32> to vector<4x96xf32>
    %c7 = arith.constant 7 : index
    %c0_87 = arith.constant 0 : index
    %89 = vector.load %arg13[%c7, %c0_87] : memref<12x96xf32, #tpu.memory_space<vmem>>, vector<4x96xf32>
    tpu.vector_store %arg13[%c7, %c0_87], %88 {strides = array<i32>} : memref<12x96xf32, #tpu.memory_space<vmem>>, vector<4x96xf32>,
    %c0_88 = arith.constant 0 : index
    %c0_89 = arith.constant 0 : index
    %90 = tpu.strided_load %arg13[%c0_88, %c0_89] {strides = array<i32: 2, 1>} : memref<12x96xf32, #tpu.memory_space<vmem>>, vector<2x96xf32>
    %91 = arith.truncf %90 : vector<2x96xf32> to vector<2x96xbf16>
    %c0_90 = arith.constant 0 : index
    %c0_91 = arith.constant 0 : index
    %92 = vector.load %arg17[%c0_90, %c0_91] : memref<4x384xbf16, #tpu.memory_space<vmem>>, vector<2x96xbf16>
    tpu.vector_store %arg17[%c0_90, %c0_91], %91 {strides = array<i32>} : memref<4x384xbf16, #tpu.memory_space<vmem>>, vector<2x96xbf16>,
    %c1_92 = arith.constant 1 : index
    %c0_93 = arith.constant 0 : index
    %93 = tpu.strided_load %arg13[%c1_92, %c0_93] {strides = array<i32: 2, 1>} : memref<12x96xf32, #tpu.memory_space<vmem>>, vector<2x96xf32>
    %94 = arith.truncf %93 : vector<2x96xf32> to vector<2x96xbf16>
    %c0_94 = arith.constant 0 : index
    %c96_95 = arith.constant 96 : index
    %95 = vector.load %arg17[%c0_94, %c96_95] : memref<4x384xbf16, #tpu.memory_space<vmem>>, vector<2x96xbf16>
    tpu.vector_store %arg17[%c0_94, %c96_95], %94 {strides = array<i32>} : memref<4x384xbf16, #tpu.memory_space<vmem>>, vector<2x96xbf16>,
    %c2_96 = arith.constant 2 : index
    %c0_97 = arith.constant 0 : index
    %96 = tpu.strided_load %arg13[%c2_96, %c0_97] {strides = array<i32: 2, 1>} : memref<12x96xf32, #tpu.memory_space<vmem>>, vector<2x96xf32>
    %97 = arith.truncf %96 : vector<2x96xf32> to vector<2x96xbf16>
    %c0_98 = arith.constant 0 : index
    %c192_99 = arith.constant 192 : index
    %98 = vector.load %arg17[%c0_98, %c192_99] : memref<4x384xbf16, #tpu.memory_space<vmem>>, vector<2x96xbf16>
    tpu.vector_store %arg17[%c0_98, %c192_99], %97 {strides = array<i32>} : memref<4x384xbf16, #tpu.memory_space<vmem>>, vector<2x96xbf16>,
    %c3_100 = arith.constant 3 : index
    %c0_101 = arith.constant 0 : index
    %99 = tpu.strided_load %arg13[%c3_100, %c0_101] {strides = array<i32: 2, 1>} : memref<12x96xf32, #tpu.memory_space<vmem>>, vector<2x96xf32>
    %100 = arith.truncf %99 : vector<2x96xf32> to vector<2x96xbf16>
    %c0_102 = arith.constant 0 : index
    %c288_103 = arith.constant 288 : index
    %101 = vector.load %arg17[%c0_102, %c288_103] : memref<4x384xbf16, #tpu.memory_space<vmem>>, vector<2x96xbf16>
    tpu.vector_store %arg17[%c0_102, %c288_103], %100 {strides = array<i32>} : memref<4x384xbf16, #tpu.memory_space<vmem>>, vector<2x96xbf16>,
    %c6 = arith.constant 6 : index
    %c0_104 = arith.constant 0 : index
    %102 = tpu.strided_load %arg13[%c6, %c0_104] {strides = array<i32: 2, 1>} : memref<12x96xf32, #tpu.memory_space<vmem>>, vector<2x96xf32>
    %103 = arith.truncf %102 : vector<2x96xf32> to vector<2x96xbf16>
    %c2_105 = arith.constant 2 : index
    %c0_106 = arith.constant 0 : index
    %104 = vector.load %arg17[%c2_105, %c0_106] : memref<4x384xbf16, #tpu.memory_space<vmem>>, vector<2x96xbf16>
    tpu.vector_store %arg17[%c2_105, %c0_106], %103 {strides = array<i32>} : memref<4x384xbf16, #tpu.memory_space<vmem>>, vector<2x96xbf16>,
    %c7_107 = arith.constant 7 : index
    %c0_108 = arith.constant 0 : index
    %105 = tpu.strided_load %arg13[%c7_107, %c0_108] {strides = array<i32: 2, 1>} : memref<12x96xf32, #tpu.memory_space<vmem>>, vector<2x96xf32>
    %106 = arith.truncf %105 : vector<2x96xf32> to vector<2x96xbf16>
    %c2_109 = arith.constant 2 : index
    %c96_110 = arith.constant 96 : index
    %107 = vector.load %arg17[%c2_109, %c96_110] : memref<4x384xbf16, #tpu.memory_space<vmem>>, vector<2x96xbf16>
    tpu.vector_store %arg17[%c2_109, %c96_110], %106 {strides = array<i32>} : memref<4x384xbf16, #tpu.memory_space<vmem>>, vector<2x96xbf16>,
    %c8_111 = arith.constant 8 : index
    %c0_112 = arith.constant 0 : index
    %108 = tpu.strided_load %arg13[%c8_111, %c0_112] {strides = array<i32: 2, 1>} : memref<12x96xf32, #tpu.memory_space<vmem>>, vector<2x96xf32>
    %109 = arith.truncf %108 : vector<2x96xf32> to vector<2x96xbf16>
    %c2_113 = arith.constant 2 : index
    %c192_114 = arith.constant 192 : index
    %110 = vector.load %arg17[%c2_113, %c192_114] : memref<4x384xbf16, #tpu.memory_space<vmem>>, vector<2x96xbf16>
    tpu.vector_store %arg17[%c2_113, %c192_114], %109 {strides = array<i32>} : memref<4x384xbf16, #tpu.memory_space<vmem>>, vector<2x96xbf16>,
    %c9 = arith.constant 9 : index
    %c0_115 = arith.constant 0 : index
    %111 = tpu.strided_load %arg13[%c9, %c0_115] {strides = array<i32: 2, 1>} : memref<12x96xf32, #tpu.memory_space<vmem>>, vector<2x96xf32>
    %112 = arith.truncf %111 : vector<2x96xf32> to vector<2x96xbf16>
    %c2_116 = arith.constant 2 : index
    %c288_117 = arith.constant 288 : index
    %113 = vector.load %arg17[%c2_116, %c288_117] : memref<4x384xbf16, #tpu.memory_space<vmem>>, vector<2x96xbf16>
    tpu.vector_store %arg17[%c2_116, %c288_117], %112 {strides = array<i32>} : memref<4x384xbf16, #tpu.memory_space<vmem>>, vector<2x96xbf16>,
    %c0_118 = arith.constant 0 : index
    %c0_119 = arith.constant 0 : index
    %114 = vector.load %arg17[%c0_118, %c0_119] : memref<4x384xbf16, #tpu.memory_space<vmem>>, vector<4x384xbf16>
    %c0_120 = arith.constant 0 : index
    %c0_121 = arith.constant 0 : index
    %c0_122 = arith.constant 0 : index
    %115 = vector.load %arg7[%c0_120, %c0_121, %c0_122] : memref<1x384x96xbf16, #tpu.memory_space<vmem>>, vector<1x384x96xbf16>
    %116 = vector.shape_cast %115 : vector<1x384x96xbf16> to vector<384x96xbf16>
    %cst_123 = arith.constant dense<0.000000e+00> : vector<4x96xf32>
    %117 = tpu.matmul %114, %116, %cst_123 {dimension_numbers = #tpu.dot_dimension_numbers<[1], [0], [0], [1], [0, 0, 1, 1], [], []>} : vector<4x384xbf16>, vector<384x96xbf16>, vector<4x96xf32> -> vector<4x96xf32>
    %c0_124 = arith.constant 0 : index
    %c0_125 = arith.constant 0 : index
    %c0_126 = arith.constant 0 : index
    %118 = vector.load %arg8[%c0_124, %c0_125, %c0_126] : memref<1x1x96xf32, #tpu.memory_space<vmem>>, vector<1x1x96xf32>
    %119 = vector.shape_cast %118 : vector<1x1x96xf32> to vector<1x96xf32>
    %120 = vector.broadcast %119 : vector<1x96xf32> to vector<4x96xf32>
    %121 = arith.addf %117, %120 : vector<4x96xf32>
    %cst_127 = arith.constant 0.000000e+00 : f32
    %122 = vector.broadcast %cst_127 : f32 to vector<4x96xf32>
    %123 = arith.maximumf %121, %122 : vector<4x96xf32>
    %124 = vector.extract_strided_slice %123 {offsets = [0, 0], sizes = [2, 96], strides = [1, 1]} : vector<4x96xf32> to vector<2x96xf32>
    %c1_128 = arith.constant 1 : index
    %c0_129 = arith.constant 0 : index
    %125 = vector.load %arg14[%c1_128, %c0_129] : memref<8x96xf32, #tpu.memory_space<vmem>>, vector<2x96xf32>
    tpu.vector_store %arg14[%c1_128, %c0_129], %124 {strides = array<i32>} : memref<8x96xf32, #tpu.memory_space<vmem>>, vector<2x96xf32>,
    %126 = vector.extract_strided_slice %123 {offsets = [2, 0], sizes = [2, 96], strides = [1, 1]} : vector<4x96xf32> to vector<2x96xf32>
    %c5 = arith.constant 5 : index
    %c0_130 = arith.constant 0 : index
    %127 = vector.load %arg14[%c5, %c0_130] : memref<8x96xf32, #tpu.memory_space<vmem>>, vector<2x96xf32>
    tpu.vector_store %arg14[%c5, %c0_130], %126 {strides = array<i32>} : memref<8x96xf32, #tpu.memory_space<vmem>>, vector<2x96xf32>,
    %c0_131 = arith.constant 0 : index
    %c0_132 = arith.constant 0 : index
    %128 = tpu.strided_load %arg14[%c0_131, %c0_132] {strides = array<i32: 2, 1>} : memref<8x96xf32, #tpu.memory_space<vmem>>, vector<1x96xf32>
    %129 = arith.truncf %128 : vector<1x96xf32> to vector<1x96xbf16>
    %c0_133 = arith.constant 0 : index
    %c0_134 = arith.constant 0 : index
    %130 = vector.load %arg18[%c0_133, %c0_134] : memref<2x384xbf16, #tpu.memory_space<vmem>>, vector<1x96xbf16>
    tpu.vector_store %arg18[%c0_133, %c0_134], %129 {strides = array<i32>} : memref<2x384xbf16, #tpu.memory_space<vmem>>, vector<1x96xbf16>,
    %c1_135 = arith.constant 1 : index
    %c0_136 = arith.constant 0 : index
    %131 = tpu.strided_load %arg14[%c1_135, %c0_136] {strides = array<i32: 2, 1>} : memref<8x96xf32, #tpu.memory_space<vmem>>, vector<1x96xf32>
    %132 = arith.truncf %131 : vector<1x96xf32> to vector<1x96xbf16>
    %c0_137 = arith.constant 0 : index
    %c96_138 = arith.constant 96 : index
    %133 = vector.load %arg18[%c0_137, %c96_138] : memref<2x384xbf16, #tpu.memory_space<vmem>>, vector<1x96xbf16>
    tpu.vector_store %arg18[%c0_137, %c96_138], %132 {strides = array<i32>} : memref<2x384xbf16, #tpu.memory_space<vmem>>, vector<1x96xbf16>,
    %c2_139 = arith.constant 2 : index
    %c0_140 = arith.constant 0 : index
    %134 = tpu.strided_load %arg14[%c2_139, %c0_140] {strides = array<i32: 2, 1>} : memref<8x96xf32, #tpu.memory_space<vmem>>, vector<1x96xf32>
    %135 = arith.truncf %134 : vector<1x96xf32> to vector<1x96xbf16>
    %c0_141 = arith.constant 0 : index
    %c192_142 = arith.constant 192 : index
    %136 = vector.load %arg18[%c0_141, %c192_142] : memref<2x384xbf16, #tpu.memory_space<vmem>>, vector<1x96xbf16>
    tpu.vector_store %arg18[%c0_141, %c192_142], %135 {strides = array<i32>} : memref<2x384xbf16, #tpu.memory_space<vmem>>, vector<1x96xbf16>,
    %c3_143 = arith.constant 3 : index
    %c0_144 = arith.constant 0 : index
    %137 = tpu.strided_load %arg14[%c3_143, %c0_144] {strides = array<i32: 2, 1>} : memref<8x96xf32, #tpu.memory_space<vmem>>, vector<1x96xf32>
    %138 = arith.truncf %137 : vector<1x96xf32> to vector<1x96xbf16>
    %c0_145 = arith.constant 0 : index
    %c288_146 = arith.constant 288 : index
    %139 = vector.load %arg18[%c0_145, %c288_146] : memref<2x384xbf16, #tpu.memory_space<vmem>>, vector<1x96xbf16>
    tpu.vector_store %arg18[%c0_145, %c288_146], %138 {strides = array<i32>} : memref<2x384xbf16, #tpu.memory_space<vmem>>, vector<1x96xbf16>,
    %c4_147 = arith.constant 4 : index
    %c0_148 = arith.constant 0 : index
    %140 = tpu.strided_load %arg14[%c4_147, %c0_148] {strides = array<i32: 2, 1>} : memref<8x96xf32, #tpu.memory_space<vmem>>, vector<1x96xf32>
    %141 = arith.truncf %140 : vector<1x96xf32> to vector<1x96xbf16>
    %c1_149 = arith.constant 1 : index
    %c0_150 = arith.constant 0 : index
    %142 = vector.load %arg18[%c1_149, %c0_150] : memref<2x384xbf16, #tpu.memory_space<vmem>>, vector<1x96xbf16>
    tpu.vector_store %arg18[%c1_149, %c0_150], %141 {strides = array<i32>} : memref<2x384xbf16, #tpu.memory_space<vmem>>, vector<1x96xbf16>,
    %c5_151 = arith.constant 5 : index
    %c0_152 = arith.constant 0 : index
    %143 = tpu.strided_load %arg14[%c5_151, %c0_152] {strides = array<i32: 2, 1>} : memref<8x96xf32, #tpu.memory_space<vmem>>, vector<1x96xf32>
    %144 = arith.truncf %143 : vector<1x96xf32> to vector<1x96xbf16>
    %c1_153 = arith.constant 1 : index
    %c96_154 = arith.constant 96 : index
    %145 = vector.load %arg18[%c1_153, %c96_154] : memref<2x384xbf16, #tpu.memory_space<vmem>>, vector<1x96xbf16>
    tpu.vector_store %arg18[%c1_153, %c96_154], %144 {strides = array<i32>} : memref<2x384xbf16, #tpu.memory_space<vmem>>, vector<1x96xbf16>,
    %c6_155 = arith.constant 6 : index
    %c0_156 = arith.constant 0 : index
    %146 = tpu.strided_load %arg14[%c6_155, %c0_156] {strides = array<i32: 2, 1>} : memref<8x96xf32, #tpu.memory_space<vmem>>, vector<1x96xf32>
    %147 = arith.truncf %146 : vector<1x96xf32> to vector<1x96xbf16>
    %c1_157 = arith.constant 1 : index
    %c192_158 = arith.constant 192 : index
    %148 = vector.load %arg18[%c1_157, %c192_158] : memref<2x384xbf16, #tpu.memory_space<vmem>>, vector<1x96xbf16>
    tpu.vector_store %arg18[%c1_157, %c192_158], %147 {strides = array<i32>} : memref<2x384xbf16, #tpu.memory_space<vmem>>, vector<1x96xbf16>,
    %c7_159 = arith.constant 7 : index
    %c0_160 = arith.constant 0 : index
    %149 = tpu.strided_load %arg14[%c7_159, %c0_160] {strides = array<i32: 2, 1>} : memref<8x96xf32, #tpu.memory_space<vmem>>, vector<1x96xf32>
    %150 = arith.truncf %149 : vector<1x96xf32> to vector<1x96xbf16>
    %c1_161 = arith.constant 1 : index
    %c288_162 = arith.constant 288 : index
    %151 = vector.load %arg18[%c1_161, %c288_162] : memref<2x384xbf16, #tpu.memory_space<vmem>>, vector<1x96xbf16>
    tpu.vector_store %arg18[%c1_161, %c288_162], %150 {strides = array<i32>} : memref<2x384xbf16, #tpu.memory_space<vmem>>, vector<1x96xbf16>,
    %c0_163 = arith.constant 0 : index
    %c0_164 = arith.constant 0 : index
    %152 = vector.load %arg18[%c0_163, %c0_164] : memref<2x384xbf16, #tpu.memory_space<vmem>>, vector<2x384xbf16>
    %c0_165 = arith.constant 0 : index
    %c0_166 = arith.constant 0 : index
    %c0_167 = arith.constant 0 : index
    %153 = vector.load %arg9[%c0_165, %c0_166, %c0_167] : memref<1x384x24xbf16, #tpu.memory_space<vmem>>, vector<1x384x24xbf16>
    %154 = vector.shape_cast %153 : vector<1x384x24xbf16> to vector<384x24xbf16>
    %cst_168 = arith.constant dense<0.000000e+00> : vector<2x24xf32>
    %155 = tpu.matmul %152, %154, %cst_168 {dimension_numbers = #tpu.dot_dimension_numbers<[1], [0], [0], [1], [0, 0, 1, 1], [], []>} : vector<2x384xbf16>, vector<384x24xbf16>, vector<2x24xf32> -> vector<2x24xf32>
    %c0_169 = arith.constant 0 : index
    %c0_170 = arith.constant 0 : index
    %c0_171 = arith.constant 0 : index
    %156 = vector.load %arg10[%c0_169, %c0_170, %c0_171] : memref<1x1x24xf32, #tpu.memory_space<vmem>>, vector<1x1x24xf32>
    %157 = vector.shape_cast %156 : vector<1x1x24xf32> to vector<1x24xf32>
    %158 = vector.broadcast %157 : vector<1x24xf32> to vector<2x24xf32>
    %159 = arith.addf %155, %158 : vector<2x24xf32>
    %cst_172 = arith.constant 0.000000e+00 : f32
    %160 = vector.broadcast %cst_172 : f32 to vector<2x24xf32>
    %161 = arith.maximumf %159, %160 : vector<2x24xf32>
    %c0_173 = arith.constant 0 : index
    %c0_174 = arith.constant 0 : index
    %c0_175 = arith.constant 0 : index
    %c0_176 = arith.constant 0 : index
    %162 = vector.load %arg11[%c0_173, %c0_174, %c0_175, %c0_176] : memref<1x1x2x24xf32, #tpu.memory_space<vmem>>, vector<1x1x2x24xf32>
    %163 = vector.shape_cast %162 : vector<1x1x2x24xf32> to vector<2x24xf32>
    %164 = vector.shape_cast %161 : vector<2x24xf32> to vector<1x1x2x24xf32>
    tpu.vector_store %arg11[%c0_173, %c0_174, %c0_175, %c0_176], %164 {strides = array<i32>} : memref<1x1x2x24xf32, #tpu.memory_space<vmem>>, vector<1x1x2x24xf32>,
    return
  }
  func.func @transform_0(%arg0: i32, %arg1: i32) -> (i32, i32, i32) {
    %c0_i32 = arith.constant 0 : i32
    %c0_i32_0 = arith.constant 0 : i32
    %c0_i32_1 = arith.constant 0 : i32
    return %arg1, %c0_i32, %c0_i32_0 : i32, i32, i32
  }
  func.func @transform_1(%arg0: i32, %arg1: i32) -> (i32, i32, i32) {
    %c0_i32 = arith.constant 0 : i32
    %c0_i32_0 = arith.constant 0 : i32
    %c0_i32_1 = arith.constant 0 : i32
    return %arg0, %c0_i32, %c0_i32_0 : i32, i32, i32
  }
  func.func @transform_2(%arg0: i32, %arg1: i32) -> (i32, i32, i32) {
    %c0_i32 = arith.constant 0 : i32
    %c0_i32_0 = arith.constant 0 : i32
    %c0_i32_1 = arith.constant 0 : i32
    return %arg0, %c0_i32, %c0_i32_0 : i32, i32, i32
  }
  func.func @transform_3(%arg0: i32, %arg1: i32) -> (i32, i32, i32) {
    %c0_i32 = arith.constant 0 : i32
    %c0_i32_0 = arith.constant 0 : i32
    %c0_i32_1 = arith.constant 0 : i32
    return %arg0, %c0_i32, %c0_i32_0 : i32, i32, i32
  }
  func.func @transform_4(%arg0: i32, %arg1: i32) -> (i32, i32, i32) {
    %c0_i32 = arith.constant 0 : i32
    %c0_i32_0 = arith.constant 0 : i32
    %c0_i32_1 = arith.constant 0 : i32
    return %arg0, %c0_i32, %c0_i32_0 : i32, i32, i32
  }
  func.func @transform_5(%arg0: i32, %arg1: i32) -> (i32, i32, i32) {
    %c0_i32 = arith.constant 0 : i32
    %c0_i32_0 = arith.constant 0 : i32
    %c0_i32_1 = arith.constant 0 : i32
    return %arg0, %c0_i32, %c0_i32_0 : i32, i32, i32
  }
  func.func @transform_6(%arg0: i32, %arg1: i32) -> (i32, i32, i32) {
    %c0_i32 = arith.constant 0 : i32
    %c0_i32_0 = arith.constant 0 : i32
    %c0_i32_1 = arith.constant 0 : i32
    return %arg0, %c0_i32, %c0_i32_0 : i32, i32, i32
  }
  func.func @transform_7(%arg0: i32, %arg1: i32) -> (i32, i32, i32) {
    %c0_i32 = arith.constant 0 : i32
    %c0_i32_0 = arith.constant 0 : i32
    %c0_i32_1 = arith.constant 0 : i32
    return %arg0, %c0_i32, %c0_i32_0 : i32, i32, i32
  }
  func.func @transform_8(%arg0: i32, %arg1: i32) -> (i32, i32, i32) {
    %c0_i32 = arith.constant 0 : i32
    %c0_i32_0 = arith.constant 0 : i32
    %c0_i32_1 = arith.constant 0 : i32
    return %arg0, %c0_i32, %c0_i32_0 : i32, i32, i32
  }
  func.func @transform_9(%arg0: i32, %arg1: i32) -> (i32, i32, i32, i32) {
    %c0_i32 = arith.constant 0 : i32
    %c0_i32_0 = arith.constant 0 : i32
    %c0_i32_1 = arith.constant 0 : i32
    return %arg0, %arg1, %c0_i32, %c0_i32_0 : i32, i32, i32, i32
  }
}

</mosaic_0001>

<llo_original>
// kernel: encoder_cmc_forward.1
$region0: #{encoder_cmc_forward.1}
  #allocation0 [shape = 'u32[]', space=smem, size = 0x4, offset = 0x4, fixed_abs, tag = 'smem constant byte address 0x4 - core index']
  #allocation1 [shape = 'u32[144,128]{1,0:T(1,128)}', space=vmem, size = 0x12000, scoped, tag = 'internal scratch']
  #allocation2 [shape = 'f32[20,96]{1,0:T(8,128)}', space=vmem, size = 0x3000, scoped, tag = 'scratch operand']
  #allocation3 [shape = 'f32[12,96]{1,0:T(8,128)}', space=vmem, size = 0x2000, scoped, tag = 'scratch operand']
  #allocation4 [shape = 'f32[8,96]{1,0:T(8,128)}', space=vmem, size = 0x1000, scoped, tag = 'scratch operand']
  #allocation5 [shape = 'bf16[16,192]{1,0:T(8,128)(2,1)}', space=vmem, size = 0x2000, scoped, tag = 'scratch operand']
  #allocation6 [shape = 'bf16[8,384]{1,0:T(8,128)(2,1)}', space=vmem, size = 0x1800, scoped, tag = 'scratch operand']
  #allocation7 [shape = 'bf16[4,384]{1,0:T(4,128)(2,1)}', space=vmem, size = 0xc00, scoped, tag = 'scratch operand']
  #allocation8 [shape = 'bf16[2,384]{1,0:T(2,128)(2,1)}', space=vmem, size = 0x600, scoped, tag = 'scratch operand']
  %s0 = inlined_call_operand.vmem [shape: f32[1,36,48], index: 0, kind: input, shape index: {}]
  %s1 = inlined_call_operand.vmem [shape: bf16[2,192,96], index: 1, kind: input, shape index: {}]
  %s2 = inlined_call_operand.vmem [shape: f32[2,1,96], index: 2, kind: input, shape index: {}]
  %s3 = inlined_call_operand.hbm [shape: bf16[2,384,96], index: 3, kind: input, shape index: {}]
  %s4 = inlined_call_operand.vmem [shape: f32[2,1,96], index: 4, kind: input, shape index: {}]
  %s5 = inlined_call_operand.hbm [shape: bf16[2,384,96], index: 5, kind: input, shape index: {}]
  %s6 = inlined_call_operand.vmem [shape: f32[2,1,96], index: 6, kind: input, shape index: {}]
  %s7 = inlined_call_operand.hbm [shape: bf16[2,384,24], index: 7, kind: input, shape index: {}]
  %s8 = inlined_call_operand.vmem [shape: f32[2,1,24], index: 8, kind: input, shape index: {}]
  %s9 = inlined_call_operand.vmem [shape: f32[2,1,2,24], index: 9, kind: output, shape index: {}]
  %s10 = sld [smem:[#allocation0]]
  $region81: #{encoder_cmc_forward.1} parent=0
    _
  %s12 = ssub.s32 1, %s10
  %s13 = scalar_select 0, %s12, %s10
  $region1: #{encoder_cmc_forward.1} parent=0
    #allocation9 [shape = 'u8[196608]{0}', space=vmem, size = 0x30000, scoped, tag = 'input window, operand 3']
    #allocation10 [shape = 's32[2]{0}', space=sflag, size = 0x8, scoped, tag = 'scoped memory for encoder_cmc_forward.1']
    #allocation11 [shape = 'u8[196608]{0}', space=vmem, size = 0x30000, scoped, tag = 'input window, operand 5']
    #allocation12 [shape = 's32[2]{0}', space=sflag, size = 0x8, scoped, tag = 'scoped memory for encoder_cmc_forward.1']
    #allocation13 [shape = 'u8[196608]{0}', space=vmem, size = 0x30000, scoped, tag = 'input window, operand 7']
    %14 = vsyncpa [#allocation10], 0
    %s15 = scalar_lea.sflag [#allocation10], 1
    %16 = vsyncpa %s15, 0
    %17 = vsyncpa [#allocation12], 0
    %s18 = scalar_lea.sflag [#allocation12], 1
    %19 = vsyncpa %s18, 0
    loop: start=0, step=1, limit=4
    $region2: #{encoder_cmc_forward.1} parent=1 // loop_pre_header
      _
    $region3: #{encoder_cmc_forward.1} parent=1 // loop_header
      %s21 = sphi 0, %s25
      %p22 = scmp.ge.s32.totalorder %s21, 4
      %s28 = sphi 0, %s40
      %s29 = sphi 0, %s36
      %s30 = sphi 0, %s28
      %s31 = sphi 0, %s29
      %s32 = sphi 0, %s30
      %s33 = sphi 0, %s31
      %s43 = sphi 0, %s45
      %s46 = sphi 0, %s43
      %s47 = sphi 0, %s46
      %s63 = sphi 0, %s47
      %s69 = sphi 0, %s71
      %s72 = sphi 0, %s69
      %s73 = sphi 0, %s72
      %s89 = sphi 0, %s73
      %s95 = sphi 0, %s97
      %s98 = sphi 0, %s95
      %s99 = sphi 0, %s98
      %s115 = sphi 0, %s99
      %s121 = sphi 0, %s123
      %s124 = sphi 0, %s121
      %s125 = sphi 0, %s124
      %s141 = sphi 0, %s125
      %s147 = sphi 0, %s149
      %s150 = sphi 0, %s147
      %s151 = sphi 0, %s150
      %s167 = sphi 0, %s151
      %s173 = sphi 0, %s175
      %s176 = sphi 0, %s173
      %s177 = sphi 0, %s176
      %s193 = sphi 0, %s177
      %s199 = sphi 0, %s201
      %s202 = sphi 0, %s199
      %s203 = sphi 0, %s202
      %s219 = sphi 0, %s203
      %s225 = sphi 0, %s227
      %s228 = sphi 0, %s225
      %s229 = sphi 0, %s228
      %s245 = sphi 0, %s229
      %s251 = sphi 0, %s253
      %s254 = sphi 0, %s251
      %s255 = sphi 0, %s254
      %s271 = sphi 0, %s255
      %s279 = sphi 0, %s281
      %s282 = sphi 0, %s279
      %s283 = sphi 0, %s282
      %s299 = sphi 0, %s283
    $region4: #{encoder_cmc_forward.1} parent=1 // loop_header_branch
      %24 = sbr.rel (%p22) target = $region8
    $region5: #{encoder_cmc_forward.1} parent=1 // loop_body
      %s26 = ssub.s32 %s21, 1
      %s27 = ssub.s32 %s21, 2
      %s34 = sadd.s32 1, %s29
      %p35 = scmp.ge.s32.totalorder %s34, 1
      %s36 = scalar_select %p35, 0, %s34
      %s37 = sadd.s32 1, %s28
      %s38 = scalar_select %p35, %s37, %s28
      %p39 = scmp.ge.s32.totalorder %s38, 2
      %s40 = scalar_select %p39, 0, %s38
      %s41 = ssub.s32 %s29, %s36
      %p42 = scmp.eq.s32.totalorder %s41, 0
      %s44 = sadd.s32 %s43, 1
      %s45 = scalar_select %p42, %s43, %s44
      %p48 = pneg %p42
      %p49 = scmp.eq.s32.totalorder %s21, 1
      %p50 = por %p48, %p49
      %p51 = scmp.ne.s32.totalorder %s43, %s46
      %p52 = scmp.eq.s32.totalorder %s21, 0
      %p53 = por %p51, %p52
      %p54 = scmp.ne.s32.totalorder %s43, %s46
      %p55 = scmp.eq.s32.totalorder %s26, 1
      %p56 = por %p54, %p55
      %p57 = scmp.ne.s32.totalorder %s46, %s47
      %p58 = scmp.eq.s32.totalorder %s26, 0
      %p59 = por %p57, %p58
      %p60 = scmp.ne.s32.totalorder %s46, %s47
      %p61 = scmp.eq.s32.totalorder %s27, 1
      %p62 = por %p60, %p61
      %p64 = scmp.ne.s32.totalorder %s47, %s63
      %p65 = scmp.eq.s32.totalorder %s27, 0
      %p66 = por %p64, %p65
      %s67 = ssub.s32 %s28, %s40
      %p68 = scmp.eq.s32.totalorder %s67, 0
      %s70 = sadd.s32 %s69, 1
      %s71 = scalar_select %p68, %s69, %s70
      %p74 = pneg %p68
      %p75 = scmp.eq.s32.totalorder %s21, 1
      %p76 = por %p74, %p75
      %p77 = scmp.ne.s32.totalorder %s69, %s72
      %p78 = scmp.eq.s32.totalorder %s21, 0
      %p79 = por %p77, %p78
      %p80 = scmp.ne.s32.totalorder %s69, %s72
      %p81 = scmp.eq.s32.totalorder %s26, 1
      %p82 = por %p80, %p81
      %p83 = scmp.ne.s32.totalorder %s72, %s73
      %p84 = scmp.eq.s32.totalorder %s26, 0
      %p85 = por %p83, %p84
      %p86 = scmp.ne.s32.totalorder %s72, %s73
      %p87 = scmp.eq.s32.totalorder %s27, 1
      %p88 = por %p86, %p87
      %p90 = scmp.ne.s32.totalorder %s73, %s89
      %p91 = scmp.eq.s32.totalorder %s27, 0
      %p92 = por %p90, %p91
      %s93 = ssub.s32 %s28, %s40
      %p94 = scmp.eq.s32.totalorder %s93, 0
      %s96 = sadd.s32 %s95, 1
      %s97 = scalar_select %p94, %s95, %s96
      %p100 = pneg %p94
      %p101 = scmp.eq.s32.totalorder %s21, 1
      %p102 = por %p100, %p101
      %p103 = scmp.ne.s32.totalorder %s95, %s98
      %p104 = scmp.eq.s32.totalorder %s21, 0
      %p105 = por %p103, %p104
      %p106 = scmp.ne.s32.totalorder %s95, %s98
      %p107 = scmp.eq.s32.totalorder %s26, 1
      %p108 = por %p106, %p107
      %p109 = scmp.ne.s32.totalorder %s98, %s99
      %p110 = scmp.eq.s32.totalorder %s26, 0
      %p111 = por %p109, %p110
      %p112 = scmp.ne.s32.totalorder %s98, %s99
      %p113 = scmp.eq.s32.totalorder %s27, 1
      %p114 = por %p112, %p113
      %p116 = scmp.ne.s32.totalorder %s99, %s115
      %p117 = scmp.eq.s32.totalorder %s27, 0
      %p118 = por %p116, %p117
      %s119 = ssub.s32 %s28, %s40
      %p120 = scmp.eq.s32.totalorder %s119, 0
      %s122 = sadd.s32 %s121, 1
      %s123 = scalar_select %p120, %s121, %s122
      %p126 = pneg %p120
      %p127 = scmp.eq.s32.totalorder %s21, 1
      %p128 = por %p126, %p127
      %p129 = scmp.ne.s32.totalorder %s121, %s124
      %p130 = scmp.eq.s32.totalorder %s21, 0
      %p131 = por %p129, %p130
      %p132 = scmp.ne.s32.totalorder %s121, %s124
      %p133 = scmp.eq.s32.totalorder %s26, 1
      %p134 = por %p132, %p133
      %p135 = scmp.ne.s32.totalorder %s124, %s125
      %p136 = scmp.eq.s32.totalorder %s26, 0
      %p137 = por %p135, %p136
      %p138 = scmp.ne.s32.totalorder %s124, %s125
      %p139 = scmp.eq.s32.totalorder %s27, 1
      %p140 = por %p138, %p139
      %p142 = scmp.ne.s32.totalorder %s125, %s141
      %p143 = scmp.eq.s32.totalorder %s27, 0
      %p144 = por %p142, %p143
      %s145 = ssub.s32 %s28, %s40
      %p146 = scmp.eq.s32.totalorder %s145, 0
      %s148 = sadd.s32 %s147, 1
      %s149 = scalar_select %p146, %s147, %s148
      %p152 = pneg %p146
      %p153 = scmp.eq.s32.totalorder %s21, 1
      %p154 = por %p152, %p153
      %p155 = scmp.ne.s32.totalorder %s147, %s150
      %p156 = scmp.eq.s32.totalorder %s21, 0
      %p157 = por %p155, %p156
      %p158 = scmp.ne.s32.totalorder %s147, %s150
      %p159 = scmp.eq.s32.totalorder %s26, 1
      %p160 = por %p158, %p159
      %p161 = scmp.ne.s32.totalorder %s150, %s151
      %p162 = scmp.eq.s32.totalorder %s26, 0
      %p163 = por %p161, %p162
      %p164 = scmp.ne.s32.totalorder %s150, %s151
      %p165 = scmp.eq.s32.totalorder %s27, 1
      %p166 = por %p164, %p165
      %p168 = scmp.ne.s32.totalorder %s151, %s167
      %p169 = scmp.eq.s32.totalorder %s27, 0
      %p170 = por %p168, %p169
      %s171 = ssub.s32 %s28, %s40
      %p172 = scmp.eq.s32.totalorder %s171, 0
      %s174 = sadd.s32 %s173, 1
      %s175 = scalar_select %p172, %s173, %s174
      %p178 = pneg %p172
      %p179 = scmp.eq.s32.totalorder %s21, 1
      %p180 = por %p178, %p179
      %p181 = scmp.ne.s32.totalorder %s173, %s176
      %p182 = scmp.eq.s32.totalorder %s21, 0
      %p183 = por %p181, %p182
      %p184 = scmp.ne.s32.totalorder %s173, %s176
      %p185 = scmp.eq.s32.totalorder %s26, 1
      %p186 = por %p184, %p185
      %p187 = scmp.ne.s32.totalorder %s176, %s177
      %p188 = scmp.eq.s32.totalorder %s26, 0
      %p189 = por %p187, %p188
      %p190 = scmp.ne.s32.totalorder %s176, %s177
      %p191 = scmp.eq.s32.totalorder %s27, 1
      %p192 = por %p190, %p191
      %p194 = scmp.ne.s32.totalorder %s177, %s193
      %p195 = scmp.eq.s32.totalorder %s27, 0
      %p196 = por %p194, %p195
      %s197 = ssub.s32 %s28, %s40
      %p198 = scmp.eq.s32.totalorder %s197, 0
      %s200 = sadd.s32 %s199, 1
      %s201 = scalar_select %p198, %s199, %s200
      %p204 = pneg %p198
      %p205 = scmp.eq.s32.totalorder %s21, 1
      %p206 = por %p204, %p205
      %p207 = scmp.ne.s32.totalorder %s199, %s202
      %p208 = scmp.eq.s32.totalorder %s21, 0
      %p209 = por %p207, %p208
      %p210 = scmp.ne.s32.totalorder %s199, %s202
      %p211 = scmp.eq.s32.totalorder %s26, 1
      %p212 = por %p210, %p211
      %p213 = scmp.ne.s32.totalorder %s202, %s203
      %p214 = scmp.eq.s32.totalorder %s26, 0
      %p215 = por %p213, %p214
      %p216 = scmp.ne.s32.totalorder %s202, %s203
      %p217 = scmp.eq.s32.totalorder %s27, 1
      %p218 = por %p216, %p217
      %p220 = scmp.ne.s32.totalorder %s203, %s219
      %p221 = scmp.eq.s32.totalorder %s27, 0
      %p222 = por %p220, %p221
      %s223 = ssub.s32 %s28, %s40
      %p224 = scmp.eq.s32.totalorder %s223, 0
      %s226 = sadd.s32 %s225, 1
      %s227 = scalar_select %p224, %s225, %s226
      %p230 = pneg %p224
      %p231 = scmp.eq.s32.totalorder %s21, 1
      %p232 = por %p230, %p231
      %p233 = scmp.ne.s32.totalorder %s225, %s228
      %p234 = scmp.eq.s32.totalorder %s21, 0
      %p235 = por %p233, %p234
      %p236 = scmp.ne.s32.totalorder %s225, %s228
      %p237 = scmp.eq.s32.totalorder %s26, 1
      %p238 = por %p236, %p237
      %p239 = scmp.ne.s32.totalorder %s228, %s229
      %p240 = scmp.eq.s32.totalorder %s26, 0
      %p241 = por %p239, %p240
      %p242 = scmp.ne.s32.totalorder %s228, %s229
      %p243 = scmp.eq.s32.totalorder %s27, 1
      %p244 = por %p242, %p243
      %p246 = scmp.ne.s32.totalorder %s229, %s245
      %p247 = scmp.eq.s32.totalorder %s27, 0
      %p248 = por %p246, %p247
      %s249 = ssub.s32 %s28, %s40
      %p250 = scmp.eq.s32.totalorder %s249, 0
      %s252 = sadd.s32 %s251, 1
      %s253 = scalar_select %p250, %s251, %s252
      %p256 = pneg %p250
      %p257 = scmp.eq.s32.totalorder %s21, 1
      %p258 = por %p256, %p257
      %p259 = scmp.ne.s32.totalorder %s251, %s254
      %p260 = scmp.eq.s32.totalorder %s21, 0
      %p261 = por %p259, %p260
      %p262 = scmp.ne.s32.totalorder %s251, %s254
      %p263 = scmp.eq.s32.totalorder %s26, 1
      %p264 = por %p262, %p263
      %p265 = scmp.ne.s32.totalorder %s254, %s255
      %p266 = scmp.eq.s32.totalorder %s26, 0
      %p267 = por %p265, %p266
      %p268 = scmp.ne.s32.totalorder %s254, %s255
      %p269 = scmp.eq.s32.totalorder %s27, 1
      %p270 = por %p268, %p269
      %p272 = scmp.ne.s32.totalorder %s255, %s271
      %p273 = scmp.eq.s32.totalorder %s27, 0
      %p274 = por %p272, %p273
      %s275 = ssub.s32 %s28, %s40
      %s276 = ssub.s32 %s29, %s36
      %s277 = sor.u32 %s275, %s276
      %p278 = scmp.eq.s32.totalorder %s277, 0
      %s280 = sadd.s32 %s279, 1
      %s281 = scalar_select %p278, %s279, %s280
      %p284 = pneg %p278
      %p285 = scmp.eq.s32.totalorder %s21, 1
      %p286 = por %p284, %p285
      %p287 = scmp.ne.s32.totalorder %s279, %s282
      %p288 = scmp.eq.s32.totalorder %s21, 0
      %p289 = por %p287, %p288
      %p290 = scmp.ne.s32.totalorder %s279, %s282
      %p291 = scmp.eq.s32.totalorder %s26, 1
      %p292 = por %p290, %p291
      %p293 = scmp.ne.s32.totalorder %s282, %s283
      %p294 = scmp.eq.s32.totalorder %s26, 0
      %p295 = por %p293, %p294
      %p296 = scmp.ne.s32.totalorder %s282, %s283
      %p297 = scmp.eq.s32.totalorder %s27, 1
      %p298 = por %p296, %p297
      %p300 = scmp.ne.s32.totalorder %s283, %s299
      %p301 = scmp.eq.s32.totalorder %s27, 0
      %p302 = por %p300, %p301
      %p303 = scmp.le.s32.totalorder 1, %s21
      %p304 = scmp.lt.s32.totalorder %s21, 3
      %p305 = pnand %p303, %p304
      %p306 = pneg %p305
      // Predicated region
      $region9: #{encoder_cmc_forward.1} parent=5 // pred_check
        _
      $region10: #{encoder_cmc_forward.1} parent=5 // pred_check_branch
        %308 = sbr.rel (%p305) target = $region12
      $region11: #{encoder_cmc_forward.1} parent=5 // pred_region
        %s309 = ssub.s32 %s21, 1
        // Predicated region
        $region13: #{encoder_cmc_forward.1} parent=11 // pred_check
          %p310 = pneg %p59
        $region14: #{encoder_cmc_forward.1} parent=11 // pred_check_branch
          %312 = sbr.rel (%p310) target = $region16
        $region15: #{encoder_cmc_forward.1} parent=11 // pred_region
          %p313 = scmp.lt.s32.totalorder %s31, 0
          %s314 = scalar_select %p313, %s31, 0
          %s315 = smul.addr %s314, 5
          %s316 = smul.addr %s315, 8
          %s317 = scalar_lea.vmem %s0, %s316
        $region16: #{encoder_cmc_forward.1} parent=11 // pred_fallthru
          _
      $region12: #{encoder_cmc_forward.1} parent=5 // pred_fallthru
        _
      %p318 = scmp.lt.s32.totalorder %s21, 2
      // Predicated region
      $region17: #{encoder_cmc_forward.1} parent=5 // pred_check
        %p319 = pneg %p318
      $region18: #{encoder_cmc_forward.1} parent=5 // pred_check_branch
        %321 = sbr.rel (%p319) target = $region20
      $region19: #{encoder_cmc_forward.1} parent=5 // pred_region
        // Predicated region
        $region21: #{encoder_cmc_forward.1} parent=19 // pred_check
          %p322 = pneg %p79
        $region22: #{encoder_cmc_forward.1} parent=19 // pred_check_branch
          %324 = sbr.rel (%p322) target = $region24
        $region23: #{encoder_cmc_forward.1} parent=19 // pred_region
          %p325 = scmp.lt.s32.totalorder %s28, 1
          %s326 = scalar_select %p325, %s28, 1
          %s327 = smul.addr %s326, 24
          %s328 = smul.addr %s327, 4
          %s329 = scalar_lea.vmem %s1, %s328
        $region24: #{encoder_cmc_forward.1} parent=19 // pred_fallthru
          _
        // Predicated region
        $region25: #{encoder_cmc_forward.1} parent=19 // pred_check
          %p330 = pneg %p105
        $region26: #{encoder_cmc_forward.1} parent=19 // pred_check_branch
          %332 = sbr.rel (%p330) target = $region28
        $region27: #{encoder_cmc_forward.1} parent=19 // pred_region
          %p333 = scmp.lt.s32.totalorder %s28, 1
          %s334 = scalar_select %p333, %s28, 1
          %s335 = scalar_lea.vmem %s2, %s334
        $region28: #{encoder_cmc_forward.1} parent=19 // pred_fallthru
          _
        // Predicated region
        $region29: #{encoder_cmc_forward.1} parent=19 // pred_check
          %p336 = pneg %p131
        $region30: #{encoder_cmc_forward.1} parent=19 // pred_check_branch
          %338 = sbr.rel (%p336) target = $region32
        $region31: #{encoder_cmc_forward.1} parent=19 // pred_region
          %s339 = sand.u32 %s121, 1
          %s340 = scalar_lea.sflag [#allocation10], %s339
          %s341 = sand.u32 %s121, 1
          %s342 = smul.addr %s341, 192
          %s343 = scalar_lea.vmem [#allocation9], %s342
          %s345 = ssub.s32 3072, 3072
          %346 = vsyncadd %s340, %s345
          %s347 = smul.addr %s28, 48
          %s348 = smul.addr %s347, 64
          %s349 = scalar_lea.hbm %s3, %s348
          %s350 = sshll.u32 %s343, 4
          %s351 = int_to_ptr.vmem [resolvable:$true] %s350
          %356 = dma.hbm_to_vmem [thread:$0]  %s349, 3072, %s351, %s340, 64, 64, 4
        $region32: #{encoder_cmc_forward.1} parent=19 // pred_fallthru
          _
        // Predicated region
        $region33: #{encoder_cmc_forward.1} parent=19 // pred_check
          %p357 = pneg %p157
        $region34: #{encoder_cmc_forward.1} parent=19 // pred_check_branch
          %359 = sbr.rel (%p357) target = $region36
        $region35: #{encoder_cmc_forward.1} parent=19 // pred_region
          %p360 = scmp.lt.s32.totalorder %s28, 1
          %s361 = scalar_select %p360, %s28, 1
          %s362 = scalar_lea.vmem %s4, %s361
        $region36: #{encoder_cmc_forward.1} parent=19 // pred_fallthru
          _
        // Predicated region
        $region37: #{encoder_cmc_forward.1} parent=19 // pred_check
          %p363 = pneg %p183
        $region38: #{encoder_cmc_forward.1} parent=19 // pred_check_branch
          %365 = sbr.rel (%p363) target = $region40
        $region39: #{encoder_cmc_forward.1} parent=19 // pred_region
          %s366 = sand.u32 %s21, 1
          %s367 = scalar_lea.sflag [#allocation12], %s366
          %s368 = sand.u32 %s173, 1
          %s369 = smul.addr %s368, 192
          %s370 = scalar_lea.vmem [#allocation11], %s369
          %s372 = ssub.s32 3072, 3072
          %373 = vsyncadd %s367, %s372
          %s374 = smul.addr %s28, 48
          %s375 = smul.addr %s374, 64
          %s376 = scalar_lea.hbm %s5, %s375
          %s377 = sshll.u32 %s370, 4
          %s378 = int_to_ptr.vmem [resolvable:$true] %s377
          %383 = dma.hbm_to_vmem [thread:$0]  %s376, 3072, %s378, %s367, 64, 64, 4
        $region40: #{encoder_cmc_forward.1} parent=19 // pred_fallthru
          _
        // Predicated region
        $region41: #{encoder_cmc_forward.1} parent=19 // pred_check
          %p384 = pneg %p209
        $region42: #{encoder_cmc_forward.1} parent=19 // pred_check_branch
          %386 = sbr.rel (%p384) target = $region44
        $region43: #{encoder_cmc_forward.1} parent=19 // pred_region
          %p387 = scmp.lt.s32.totalorder %s28, 1
          %s388 = scalar_select %p387, %s28, 1
          %s389 = scalar_lea.vmem %s6, %s388
        $region44: #{encoder_cmc_forward.1} parent=19 // pred_fallthru
          _
        // Predicated region
        $region45: #{encoder_cmc_forward.1} parent=19 // pred_check
          %p390 = pneg %p235
        $region46: #{encoder_cmc_forward.1} parent=19 // pred_check_branch
          %392 = sbr.rel (%p390) target = $region48
        $region47: #{encoder_cmc_forward.1} parent=19 // pred_region
          %s393 = sand.u32 %s21, 1
          %s394 = scalar_lea.sflag [#allocation12], %s393
          %s395 = sand.u32 %s225, 1
          %s396 = smul.addr %s395, 192
          %s397 = scalar_lea.vmem [#allocation13], %s396
          %s399 = ssub.s32 3072, 3072
          %400 = vsyncadd %s394, %s399
          %s401 = smul.addr %s28, 48
          %s402 = smul.addr %s401, 64
          %s403 = scalar_lea.hbm %s7, %s402
          %s404 = sshll.u32 %s397, 4
          %s405 = int_to_ptr.vmem [resolvable:$true] %s404
          %410 = dma.hbm_to_vmem [thread:$0]  %s403, 3072, %s405, %s394, 64, 64, 4
        $region48: #{encoder_cmc_forward.1} parent=19 // pred_fallthru
          _
        // Predicated region
        $region49: #{encoder_cmc_forward.1} parent=19 // pred_check
          %p411 = pneg %p261
        $region50: #{encoder_cmc_forward.1} parent=19 // pred_check_branch
          %413 = sbr.rel (%p411) target = $region52
        $region51: #{encoder_cmc_forward.1} parent=19 // pred_region
          %p414 = scmp.lt.s32.totalorder %s28, 1
          %s415 = scalar_select %p414, %s28, 1
          %s416 = scalar_lea.vmem %s8, %s415
        $region52: #{encoder_cmc_forward.1} parent=19 // pred_fallthru
          _
      $region20: #{encoder_cmc_forward.1} parent=5 // pred_fallthru
        _
      %p417 = scmp.le.s32.totalorder 1, %s21
      %p418 = scmp.lt.s32.totalorder %s21, 3
      %p419 = pnand %p417, %p418
      %p420 = pneg %p419
      // Predicated region
      $region53: #{encoder_cmc_forward.1} parent=5 // pred_check
        _
      $region54: #{encoder_cmc_forward.1} parent=5 // pred_check_branch
        %422 = sbr.rel (%p419) target = $region56
      $region55: #{encoder_cmc_forward.1} parent=5 // pred_region
        %s423 = ssub.s32 %s21, 1
        %s424 = sand.u32 %s124, 1
        %s425 = scalar_lea.sflag [#allocation10], %s424
        %s426 = sand.u32 %s124, 1
        %s427 = smul.addr %s426, 192
        %s428 = scalar_lea.vmem [#allocation9], %s427
        // Predicated region
        $region57: #{encoder_cmc_forward.1} parent=55 // pred_check
          %p429 = pneg %p137
        $region58: #{encoder_cmc_forward.1} parent=55 // pred_check_branch
          %431 = sbr.rel (%p429) target = $region60
        $region59: #{encoder_cmc_forward.1} parent=55 // pred_region
          %432 = dma.done %s425, 3072
        $region60: #{encoder_cmc_forward.1} parent=55 // pred_fallthru
          _
        %s433 = sand.u32 %s26, 1
        %s434 = scalar_lea.sflag [#allocation12], %s433
        %s435 = sand.u32 %s176, 1
        %s436 = smul.addr %s435, 192
        %s437 = scalar_lea.vmem [#allocation11], %s436
        // Predicated region
        $region61: #{encoder_cmc_forward.1} parent=55 // pred_check
          %p438 = pneg %p189
        $region62: #{encoder_cmc_forward.1} parent=55 // pred_check_branch
          %440 = sbr.rel (%p438) target = $region64
        $region63: #{encoder_cmc_forward.1} parent=55 // pred_region
          %441 = dma.done %s434, 3072
        $region64: #{encoder_cmc_forward.1} parent=55 // pred_fallthru
          _
        %s442 = sand.u32 %s26, 1
        %s443 = scalar_lea.sflag [#allocation12], %s442
        %s444 = sand.u32 %s228, 1
        %s445 = smul.addr %s444, 192
        %s446 = scalar_lea.vmem [#allocation13], %s445
        // Predicated region
        $region65: #{encoder_cmc_forward.1} parent=55 // pred_check
          %p447 = pneg %p241
        $region66: #{encoder_cmc_forward.1} parent=55 // pred_check_branch
          %449 = sbr.rel (%p447) target = $region68
        $region67: #{encoder_cmc_forward.1} parent=55 // pred_region
          %450 = dma.done %s443, 3072
        $region68: #{encoder_cmc_forward.1} parent=55 // pred_fallthru
          _
        %p451 = scmp.lt.s32.totalorder %s31, 0
        %s452 = scalar_select %p451, %s31, 0
        %s453 = smul.addr %s452, 5
        %s454 = smul.addr %s453, 8
        %s455 = scalar_lea.vmem %s0, %s454
        %p456 = pneg %p59
        %p457 = pneg %p56
        %p458 = scmp.lt.s32.totalorder %s30, 1
        %s459 = scalar_select %p458, %s30, 1
        %s460 = smul.addr %s459, 24
        %s461 = smul.addr %s460, 4
        %s462 = scalar_lea.vmem %s1, %s461
        %p463 = pneg %p85
        %p464 = pneg %p82
        %p465 = scmp.lt.s32.totalorder %s30, 1
        %s466 = scalar_select %p465, %s30, 1
        %s467 = scalar_lea.vmem %s2, %s466
        %p468 = pneg %p111
        %p469 = pneg %p108
        %s470 = sand.u32 %s124, 1
        %s471 = scalar_lea.sflag [#allocation10], %s470
        %s472 = sand.u32 %s124, 1
        %s473 = smul.addr %s472, 192
        %s474 = scalar_lea.vmem [#allocation9], %s473
        %p475 = pneg %p137
        %p476 = pneg %p134
        %p477 = scmp.lt.s32.totalorder %s30, 1
        %s478 = scalar_select %p477, %s30, 1
        %s479 = scalar_lea.vmem %s4, %s478
        %p480 = pneg %p163
        %p481 = pneg %p160
        %s482 = sand.u32 %s26, 1
        %s483 = scalar_lea.sflag [#allocation12], %s482
        %s484 = sand.u32 %s176, 1
        %s485 = smul.addr %s484, 192
        %s486 = scalar_lea.vmem [#allocation11], %s485
        %p487 = pneg %p189
        %p488 = pneg %p186
        %p489 = scmp.lt.s32.totalorder %s30, 1
        %s490 = scalar_select %p489, %s30, 1
        %s491 = scalar_lea.vmem %s6, %s490
        %p492 = pneg %p215
        %p493 = pneg %p212
        %s494 = sand.u32 %s26, 1
        %s495 = scalar_lea.sflag [#allocation12], %s494
        %s496 = sand.u32 %s228, 1
        %s497 = smul.addr %s496, 192
        %s498 = scalar_lea.vmem [#allocation13], %s497
        %p499 = pneg %p241
        %p500 = pneg %p238
        %p501 = scmp.lt.s32.totalorder %s30, 1
        %s502 = scalar_select %p501, %s30, 1
        %s503 = scalar_lea.vmem %s8, %s502
        %p504 = pneg %p267
        %p505 = pneg %p264
        %p506 = pneg %p295
        %p507 = pneg %p292
        %p508 = scmp.lt.s32.totalorder %s30, 1
        %s509 = scalar_select %p508, %s30, 1
        %p510 = scmp.lt.s32.totalorder %s31, 0
        %s511 = scalar_select %p510, %s31, 0
        %s512 = sadd.s32 %s511, %s509
        %s513 = smul.addr %s512, 2
        %s514 = scalar_lea.vmem %s9, %s513
        %p515 = scmp.lt.s32.totalorder %s31, 0
        %s516 = scalar_select %p515, %s31, 0
        %s517 = smul.addr %s516, 5
        %s518 = smul.addr %s517, 8
        %s519 = scalar_lea.vmem %s0, %s518
        %p520 = scmp.lt.s32.totalorder %s30, 1
        %s521 = scalar_select %p520, %s30, 1
        %s522 = smul.addr %s521, 24
        %s523 = smul.addr %s522, 4
        %s524 = scalar_lea.vmem %s1, %s523
        %p525 = scmp.lt.s32.totalorder %s30, 1
        %s526 = scalar_select %p525, %s30, 1
        %s527 = scalar_lea.vmem %s2, %s526
        %p528 = scmp.lt.s32.totalorder %s30, 1
        %s529 = scalar_select %p528, %s30, 1
        %s530 = scalar_lea.vmem %s4, %s529
        %p531 = scmp.lt.s32.totalorder %s30, 1
        %s532 = scalar_select %p531, %s30, 1
        %s533 = scalar_lea.vmem %s6, %s532
        %p534 = scmp.lt.s32.totalorder %s30, 1
        %s535 = scalar_select %p534, %s30, 1
        %s536 = scalar_lea.vmem %s8, %s535
        %p537 = scmp.lt.s32.totalorder %s30, 1
        %s538 = scalar_select %p537, %s30, 1
        %p539 = scmp.lt.s32.totalorder %s31, 0
        %s540 = scalar_select %p539, %s31, 0
        %s541 = sadd.s32 %s540, %s538
        %s542 = smul.addr %s541, 2
        %s543 = scalar_lea.vmem %s9, %s542
        %vm545 = vcmask 785408
        %546 = vst.msk [vmem:[#allocation2] sm:$0xff] %vm545, 0.0
        %547 = vst.msk [vmem:[#allocation2 + $0x8] sm:$0xff] %vm545, 0.0
        %vm548 = vcmask 781312
        %549 = vst.msk [vmem:[#allocation2 + $0x10] sm:$0xf] %vm548, 0.0
        %550 = vst.msk [vmem:[#allocation3] sm:$0xff] %vm545, 0.0
        %551 = vst.msk [vmem:[#allocation3 + $0x8] sm:$0xf] %vm548, 0.0
        %552 = vst.msk [vmem:[#allocation4] sm:$0xff] %vm545, 0.0
        %v553 = vld [vmem:[%s519] ss:$2 sm:$0xff]
        %v554 = vpack.c.bf16 %v553, %v553
        %vm555 = vcmask 388096
        %556 = vst.msk [vmem:[#allocation5] sm:$0xf] %vm555, %v554
        %s557 = scalar_lea.vmem %s519, 1
        %v558 = vld [vmem:[%s557] ss:$2 sm:$0xff]
        %v559 = vpack.c.bf16 %v558, %v558
        %v561 = vunpack.c.l.b16 %v559
        %v562 = vpack.c.b16 %v561, %v561
        %563 = vrot.lane.b32.xlu0 %v562, 48
        %v564 = vpop.permute.xlu0 %563
        %vm566 = vcmask 781696
        %567 = vst.msk [vmem:[#allocation5] sm:$0xf] %vm566, %v564
        %s568 = scalar_lea.vmem %s519, 2
        %v569 = vld [vmem:[%s568] ss:$2 sm:$0xff]
        %v570 = vpack.c.bf16 %v569, %v569
        %v572 = vunpack.c.l.b16 %v570
        %v573 = vpack.c.b16 %v572, %v572
        %574 = vrot.lane.b32.xlu0 %v573, 96
        %v575 = vpop.permute.xlu0 %574
        %v576 = vrot.slane %v575, 4
        %vm577 = vcmask 785408
        %v578 = vsel %vm577, %v576, %v575
        %vm580 = vcmask 1044224
        %vm581 = vcmask 130052
        %vm582 = vmor %vm581, %vm580
        %583 = vst.msk [vmem:[#allocation5] sm:$0xff] %vm582, %v578
        %s584 = scalar_lea.vmem %s519, 3
        %v585 = vld [vmem:[%s584] ss:$2 sm:$0xff]
        %v586 = vpack.c.bf16 %v585, %v585
        %v588 = vunpack.c.l.b16 %v586
        %v589 = vpack.c.b16 %v588, %v588
        %590 = vrot.lane.b32.xlu0 %v589, 16
        %v591 = vpop.permute.xlu0 %590
        %vm593 = vcmask 519296
        %594 = vst.msk [vmem:[#allocation5 + $0x4] sm:$0xf] %vm593, %v591
        %s595 = scalar_lea.vmem %s519, 18
        %v596 = vld [vmem:[%s595] ss:$2 sm:$0xff]
        %v597 = vpack.c.bf16 %v596, %v596
        %598 = vst.msk [vmem:[#allocation5 + $0x8] sm:$0xf] %vm555, %v597
        %s599 = scalar_lea.vmem %s519, 19
        %v600 = vld [vmem:[%s599] ss:$2 sm:$0xff]
        %v601 = vpack.c.bf16 %v600, %v600
        %v603 = vunpack.c.l.b16 %v601
        %v604 = vpack.c.b16 %v603, %v603
        %605 = vrot.lane.b32.xlu0 %v604, 48
        %v606 = vpop.permute.xlu0 %605
        %608 = vst.msk [vmem:[#allocation5 + $0x8] sm:$0xf] %vm566, %v606
        %s609 = scalar_lea.vmem %s519, 20
        %v610 = vld [vmem:[%s609] ss:$2 sm:$0xff]
        %v611 = vpack.c.bf16 %v610, %v610
        %v613 = vunpack.c.l.b16 %v611
        %v614 = vpack.c.b16 %v613, %v613
        %615 = vrot.lane.b32.xlu0 %v614, 96
        %v616 = vpop.permute.xlu0 %615
        %v617 = vrot.slane %v616, 4
        %v618 = vsel %vm577, %v617, %v616
        %620 = vst.msk [vmem:[#allocation5 + $0x8] sm:$0xff] %vm582, %v618
        %s621 = scalar_lea.vmem %s519, 21
        %v622 = vld [vmem:[%s621] ss:$2 sm:$0xff]
        %v623 = vpack.c.bf16 %v622, %v622
        %v625 = vunpack.c.l.b16 %v623
        %v626 = vpack.c.b16 %v625, %v625
        %627 = vrot.lane.b32.xlu0 %v626, 16
        %v628 = vpop.permute.xlu0 %627
        %630 = vst.msk [vmem:[#allocation5 + $0xc] sm:$0xf] %vm593, %v628
        %v631 = vld [vmem:[#allocation5] sm:$0xff]
        %v632 = vld [vmem:[#allocation5 + $0x8] sm:$0xff]
        %v633 = vld [vmem:[%s524] sm:$0xf]
        %v634 = vld [vmem:[%s524 + $0x4] sm:$0xf]
        %v635 = vld [vmem:[%s524 + $0x8] sm:$0xf]
        %v636 = vld [vmem:[%s524 + $0xc] sm:$0xf]
        %v637 = vld [vmem:[%s524 + $0x10] sm:$0xf]
        %v638 = vld [vmem:[%s524 + $0x14] sm:$0xf]
        %v639 = vld [vmem:[%s524 + $0x18] sm:$0xf]
        %v640 = vld [vmem:[%s524 + $0x1c] sm:$0xf]
        %v641 = vld [vmem:[%s524 + $0x20] sm:$0xf]
        %v642 = vld [vmem:[%s524 + $0x24] sm:$0xf]
        %v643 = vld [vmem:[%s524 + $0x28] sm:$0xf]
        %v644 = vld [vmem:[%s524 + $0x2c] sm:$0xf]
        %v645 = vld [vmem:[%s524 + $0x30] sm:$0xf]
        %v646 = vld [vmem:[%s524 + $0x34] sm:$0xf]
        %v647 = vld [vmem:[%s524 + $0x38] sm:$0xf]
        %v648 = vld [vmem:[%s524 + $0x3c] sm:$0xf]
        %v649 = vld [vmem:[%s524 + $0x40] sm:$0xf]
        %v650 = vld [vmem:[%s524 + $0x44] sm:$0xf]
        %v651 = vld [vmem:[%s524 + $0x48] sm:$0xf]
        %v652 = vld [vmem:[%s524 + $0x4c] sm:$0xf]
        %v653 = vld [vmem:[%s524 + $0x50] sm:$0xf]
        %v654 = vld [vmem:[%s524 + $0x54] sm:$0xf]
        %v655 = vld [vmem:[%s524 + $0x58] sm:$0xf]
        %v656 = vld [vmem:[%s524 + $0x5c] sm:$0xf]
        %v657 = vld [vmem:[%s527] sm:$0x1]
        %v659 = vlaneseq
        %v660 = vshrl.u32 %v659, 7
        %v661 = vsub.s32 0, %v660
        %v662 = vrot.slane %v657, %v661
        %v666 = vunpack.c.l.b16 %v631
        %v667 = vunpack.c.h.b16 %v631
        %v668 = vunpack.c.l.b16 %v632
        %v669 = vunpack.c.h.b16 %v632
        %v670 = vpack.c.b16 %v668, %v666
        %v671 = vpack.c.b16 %v669, %v667
        %v697 = vunpack.c.l.b16 %v633
        %v698 = vunpack.c.l.b16 %v634
        %v699 = vunpack.c.l.b16 %v635
        %v700 = vunpack.c.l.b16 %v636
        %v701 = vunpack.c.l.b16 %v637
        %v702 = vunpack.c.l.b16 %v638
        %v703 = vunpack.c.l.b16 %v639
        %v704 = vunpack.c.l.b16 %v640
        %v705 = vunpack.c.l.b16 %v641
        %v706 = vunpack.c.l.b16 %v642
        %v707 = vunpack.c.l.b16 %v643
        %v708 = vunpack.c.l.b16 %v644
        %v709 = vunpack.c.l.b16 %v645
        %v710 = vunpack.c.l.b16 %v646
        %v711 = vunpack.c.l.b16 %v647
        %v712 = vunpack.c.l.b16 %v648
        %v713 = vunpack.c.l.b16 %v649
        %v714 = vunpack.c.l.b16 %v650
        %v715 = vunpack.c.l.b16 %v651
        %v716 = vunpack.c.l.b16 %v652
        %v717 = vunpack.c.l.b16 %v653
        %v718 = vunpack.c.l.b16 %v654
        %v719 = vunpack.c.l.b16 %v655
        %v720 = vunpack.c.l.b16 %v656
        %v721 = vpack.c.b16 %v698, %v697
        %v722 = vpack.c.b16 %v700, %v699
        %v723 = vpack.c.b16 %v702, %v701
        %v724 = vpack.c.b16 %v704, %v703
        %v725 = vpack.c.b16 %v706, %v705
        %v726 = vpack.c.b16 %v708, %v707
        %v727 = vpack.c.b16 %v710, %v709
        %v728 = vpack.c.b16 %v712, %v711
        %v729 = vpack.c.b16 %v714, %v713
        %v730 = vpack.c.b16 %v716, %v715
        %v731 = vpack.c.b16 %v718, %v717
        %v732 = vpack.c.b16 %v720, %v719
        %vm745 = vcmask 523264
        %v747 = vsel %vm745, %v671, 0
        %749 = vmatprep.subr.bf16.mxu0 0
        %750 = vmatpush1.bf16.msra.mxu0 %v728
        %751 = vmatprep.subr.bf16.mxu0 0
        %752 = vmatpush1.bf16.msra.mxu0 %v727
        %753 = vmatprep.subr.bf16.mxu0 0
        %754 = vmatpush1.bf16.msra.mxu0 %v726
        %755 = vmatprep.subr.bf16.mxu0 0
        %756 = vmatpush1.bf16.msra.mxu0 %v725
        %757 = vmatprep.subr.bf16.mxu0 0
        %758 = vmatpush1.bf16.msra.mxu0 %v724
        %759 = vmatprep.subr.bf16.mxu0 0
        %760 = vmatpush1.bf16.msra.mxu0 %v723
        %761 = vmatprep.subr.bf16.mxu0 0
        %762 = vmatpush1.bf16.msra.mxu0 %v722
        %763 = vmatprep.subr.bf16.mxu0 0
        %764 = vmatpush1.bf16.msra.mxu0 %v721
        %765 = vmatprep.subr.bf16.mxu0 0
        %766 = vmatpush2.bf16.msra.mxu0 0
        %767 = vmatprep.subr.bf16.mxu0 0
        %768 = vmatpush2.bf16.msra.mxu0 0
        %769 = vmatprep.subr.bf16.mxu0 0
        %770 = vmatpush2.bf16.msra.mxu0 0
        %771 = vmatprep.subr.bf16.mxu0 0
        %772 = vmatpush2.bf16.msra.mxu0 0
        %773 = vmatprep.subr.bf16.mxu0 0
        %774 = vmatpush2.bf16.msra.mxu0 %v732
        %775 = vmatprep.subr.bf16.mxu0 0
        %776 = vmatpush2.bf16.msra.mxu0 %v731
        %777 = vmatprep.subr.bf16.mxu0 0
        %778 = vmatpush2.bf16.msra.mxu0 %v730
        %779 = vmatprep.subr.bf16.mxu0 0
        %780 = vmatpush2.bf16.msra.mxu0 %v729
        %781 = vmatprep.mubr.bf16.mxu0 %v747
        %782 = vmatmul.mubr.bf16.gmra.mxu0 %v670
        %v783 = vpop.f32.mrf.mxu0
        %v784 = vadd.f32 %v662, %v783
        %v785 = vpop.f32.mrf.mxu0
        %v786 = vpop.f32.mrf.mxu0
        %v787 = vadd.f32 %v662, %v786
        %v788 = vpop.f32.mrf.mxu0
        %789 = vdwg.mxu0
        %v790 = vmax.f32 %v784, 0.0
        %v791 = vmax.f32 %v787, 0.0
        %792 = vst.msk [vmem:[#allocation2 + $0x1] sm:$0xff] %vm545, %v790
        %793 = vst.msk [vmem:[#allocation2 + $0xb] sm:$0xff] %vm545, %v791
        %v794 = vld [vmem:[#allocation2] ss:$2 sm:$0xf]
        %v795 = vpack.c.bf16 %v794, %v794
        %vm796 = vcmask 779264
        %797 = vst.msk [vmem:[#allocation6] sm:$0x3] %vm796, %v795
        %s798 = scalar_lea.vmem [#allocation2], 1
        %v799 = vld [vmem:[%s798] ss:$2 sm:$0xf]
        %v800 = vpack.c.bf16 %v799, %v799
        %v802 = vunpack.c.l.b16 %v800
        %v803 = vpack.c.b16 %v802, %v802
        %804 = vrot.lane.b32.xlu0 %v803, 96
        %v805 = vpop.permute.xlu0 %804
        %v806 = vrot.slane %v805, 4
        %v807 = vsel %vm577, %v806, %v805
        %vm809 = vcmask 1042176
        %vm810 = vcmask 521220
        %vm811 = vmor %vm810, %vm809
        %812 = vst.msk [vmem:[#allocation6] sm:$0x33] %vm811, %v807
        %s813 = scalar_lea.vmem [#allocation2], 2
        %v814 = vld [vmem:[%s813] ss:$2 sm:$0xf]
        %v815 = vpack.c.bf16 %v814, %v814
        %v817 = vunpack.c.l.b16 %v815
        %v818 = vpack.c.b16 %v817, %v817
        %819 = vrot.lane.b32.xlu0 %v818, 64
        %v820 = vpop.permute.xlu0 %819
        %v821 = vrot.slane %v820, 4
        %vm822 = vcmask 523264
        %v823 = vsel %vm822, %v821, %v820
        %vm825 = vcmask 1041920
        %vm826 = vcmask 259076
        %vm827 = vmor %vm826, %vm825
        %828 = vst.msk [vmem:[#allocation6 + $0x4] sm:$0x33] %vm827, %v823
        %s829 = scalar_lea.vmem [#allocation2], 3
        %v830 = vld [vmem:[%s829] ss:$2 sm:$0xf]
        %v831 = vpack.c.bf16 %v830, %v830
        %v833 = vunpack.c.l.b16 %v831
        %v834 = vpack.c.b16 %v833, %v833
        %835 = vrot.lane.b32.xlu0 %v834, 32
        %v836 = vpop.permute.xlu0 %835
        %vm838 = vcmask 1041664
        %839 = vst.msk [vmem:[#allocation6 + $0x8] sm:$0x3] %vm838, %v836
        %s840 = scalar_lea.vmem [#allocation2], 10
        %v841 = vld [vmem:[%s840] ss:$2 sm:$0xf]
        %v842 = vpack.c.bf16 %v841, %v841
        %v844 = vunpack.c.l.b16 %v842
        %v845 = vpack.c.b16 %v844, %v844
        %v846 = vrot.slane %v845, 6
        %vm848 = vcmask 781314
        %849 = vst.msk [vmem:[#allocation6] sm:$0xc] %vm848, %v846
        %s850 = scalar_lea.vmem [#allocation2], 11
        %v851 = vld [vmem:[%s850] ss:$2 sm:$0xf]
        %v852 = vpack.c.bf16 %v851, %v851
        %v854 = vunpack.c.l.b16 %v852
        %v855 = vpack.c.b16 %v854, %v854
        %v856 = vrot.slane %v855, 6
        %857 = vrot.lane.b32.xlu0 %v856, 96
        %v858 = vpop.permute.xlu0 %857
        %v859 = vrot.slane %v858, 4
        %v860 = vsel %vm577, %v859, %v858
        %vm862 = vcmask 1044226
        %vm863 = vcmask 523270
        %vm864 = vmor %vm863, %vm862
        %865 = vst.msk [vmem:[#allocation6] sm:$0xcc] %vm864, %v860
        %s866 = scalar_lea.vmem [#allocation2], 12
        %v867 = vld [vmem:[%s866] ss:$2 sm:$0xf]
        %v868 = vpack.c.bf16 %v867, %v867
        %v870 = vunpack.c.l.b16 %v868
        %v871 = vpack.c.b16 %v870, %v870
        %v872 = vrot.slane %v871, 6
        %873 = vrot.lane.b32.xlu0 %v872, 64
        %v874 = vpop.permute.xlu0 %873
        %v875 = vrot.slane %v874, 4
        %v876 = vsel %vm822, %v875, %v874
        %vm878 = vcmask 1043970
        %vm879 = vcmask 261126
        %vm880 = vmor %vm879, %vm878
        %881 = vst.msk [vmem:[#allocation6 + $0x4] sm:$0xcc] %vm880, %v876
        %s882 = scalar_lea.vmem [#allocation2], 13
        %v883 = vld [vmem:[%s882] ss:$2 sm:$0xf]
        %v884 = vpack.c.bf16 %v883, %v883
        %v886 = vunpack.c.l.b16 %v884
        %v887 = vpack.c.b16 %v886, %v886
        %v888 = vrot.slane %v887, 6
        %889 = vrot.lane.b32.xlu0 %v888, 32
        %v890 = vpop.permute.xlu0 %889
        %vm892 = vcmask 1043714
        %893 = vst.msk [vmem:[#allocation6 + $0x8] sm:$0xc] %vm892, %v890
        %v894 = vld [vmem:[#allocation6] sm:$0xff]
        %v895 = vld [vmem:[#allocation6 + $0x8] sm:$0xf]
        %v896 = vld [vmem:[%s428] sm:$0xf]
        %v897 = vld [vmem:[%s428 + $0x4] sm:$0xf]
        %v898 = vld [vmem:[%s428 + $0x8] sm:$0xf]
        %v899 = vld [vmem:[%s428 + $0xc] sm:$0xf]
        %v900 = vld [vmem:[%s428 + $0x10] sm:$0xf]
        %v901 = vld [vmem:[%s428 + $0x14] sm:$0xf]
        %v902 = vld [vmem:[%s428 + $0x18] sm:$0xf]
        %v903 = vld [vmem:[%s428 + $0x1c] sm:$0xf]
        %v904 = vld [vmem:[%s428 + $0x20] sm:$0xf]
        %v905 = vld [vmem:[%s428 + $0x24] sm:$0xf]
        %v906 = vld [vmem:[%s428 + $0x28] sm:$0xf]
        %v907 = vld [vmem:[%s428 + $0x2c] sm:$0xf]
        %v908 = vld [vmem:[%s428 + $0x30] sm:$0xf]
        %v909 = vld [vmem:[%s428 + $0x34] sm:$0xf]
        %v910 = vld [vmem:[%s428 + $0x38] sm:$0xf]
        %v911 = vld [vmem:[%s428 + $0x3c] sm:$0xf]
        %v912 = vld [vmem:[%s428 + $0x40] sm:$0xf]
        %v913 = vld [vmem:[%s428 + $0x44] sm:$0xf]
        %v914 = vld [vmem:[%s428 + $0x48] sm:$0xf]
        %v915 = vld [vmem:[%s428 + $0x4c] sm:$0xf]
        %v916 = vld [vmem:[%s428 + $0x50] sm:$0xf]
        %v917 = vld [vmem:[%s428 + $0x54] sm:$0xf]
        %v918 = vld [vmem:[%s428 + $0x58] sm:$0xf]
        %v919 = vld [vmem:[%s428 + $0x5c] sm:$0xf]
        %v920 = vld [vmem:[%s428 + $0x60] sm:$0xf]
        %v921 = vld [vmem:[%s428 + $0x64] sm:$0xf]
        %v922 = vld [vmem:[%s428 + $0x68] sm:$0xf]
        %v923 = vld [vmem:[%s428 + $0x6c] sm:$0xf]
        %v924 = vld [vmem:[%s428 + $0x70] sm:$0xf]
        %v925 = vld [vmem:[%s428 + $0x74] sm:$0xf]
        %v926 = vld [vmem:[%s428 + $0x78] sm:$0xf]
        %v927 = vld [vmem:[%s428 + $0x7c] sm:$0xf]
        %v928 = vld [vmem:[%s428 + $0x80] sm:$0xf]
        %v929 = vld [vmem:[%s428 + $0x84] sm:$0xf]
        %v930 = vld [vmem:[%s428 + $0x88] sm:$0xf]
        %v931 = vld [vmem:[%s428 + $0x8c] sm:$0xf]
        %v932 = vld [vmem:[%s428 + $0x90] sm:$0xf]
        %v933 = vld [vmem:[%s428 + $0x94] sm:$0xf]
        %v934 = vld [vmem:[%s428 + $0x98] sm:$0xf]
        %v935 = vld [vmem:[%s428 + $0x9c] sm:$0xf]
        %v936 = vld [vmem:[%s428 + $0xa0] sm:$0xf]
        %v937 = vld [vmem:[%s428 + $0xa4] sm:$0xf]
        %v938 = vld [vmem:[%s428 + $0xa8] sm:$0xf]
        %v939 = vld [vmem:[%s428 + $0xac] sm:$0xf]
        %v940 = vld [vmem:[%s428 + $0xb0] sm:$0xf]
        %v941 = vld [vmem:[%s428 + $0xb4] sm:$0xf]
        %v942 = vld [vmem:[%s428 + $0xb8] sm:$0xf]
        %v943 = vld [vmem:[%s428 + $0xbc] sm:$0xf]
        %v944 = vld [vmem:[%s530] sm:$0x1]
        %v946 = vlaneseq
        %v947 = vshrl.u32 %v946, 7
        %v948 = vsub.s32 0, %v947
        %v949 = vrot.slane %v944, %v948
        %v953 = vunpack.c.l.b16 %v894
        %v954 = vunpack.c.h.b16 %v894
        %v955 = vunpack.c.l.b16 %v895
        %v956 = vpack.c.b16 %v953, %v953
        %v957 = vpack.c.b16 %v954, %v954
        %v958 = vpack.c.b16 %v955, %v955
        %v1010 = vunpack.c.l.b16 %v896
        %v1011 = vunpack.c.l.b16 %v897
        %v1012 = vunpack.c.l.b16 %v898
        %v1013 = vunpack.c.l.b16 %v899
        %v1014 = vunpack.c.l.b16 %v900
        %v1015 = vunpack.c.l.b16 %v901
        %v1016 = vunpack.c.l.b16 %v902
        %v1017 = vunpack.c.l.b16 %v903
        %v1018 = vunpack.c.l.b16 %v904
        %v1019 = vunpack.c.l.b16 %v905
        %v1020 = vunpack.c.l.b16 %v906
        %v1021 = vunpack.c.l.b16 %v907
        %v1022 = vunpack.c.l.b16 %v908
        %v1023 = vunpack.c.l.b16 %v909
        %v1024 = vunpack.c.l.b16 %v910
        %v1025 = vunpack.c.l.b16 %v911
        %v1026 = vunpack.c.l.b16 %v912
        %v1027 = vunpack.c.l.b16 %v913
        %v1028 = vunpack.c.l.b16 %v914
        %v1029 = vunpack.c.l.b16 %v915
        %v1030 = vunpack.c.l.b16 %v916
        %v1031 = vunpack.c.l.b16 %v917
        %v1032 = vunpack.c.l.b16 %v918
        %v1033 = vunpack.c.l.b16 %v919
        %v1034 = vunpack.c.l.b16 %v920
        %v1035 = vunpack.c.l.b16 %v921
        %v1036 = vunpack.c.l.b16 %v922
        %v1037 = vunpack.c.l.b16 %v923
        %v1038 = vunpack.c.l.b16 %v924
        %v1039 = vunpack.c.l.b16 %v925
        %v1040 = vunpack.c.l.b16 %v926
        %v1041 = vunpack.c.l.b16 %v927
        %v1042 = vunpack.c.l.b16 %v928
        %v1043 = vunpack.c.l.b16 %v929
        %v1044 = vunpack.c.l.b16 %v930
        %v1045 = vunpack.c.l.b16 %v931
        %v1046 = vunpack.c.l.b16 %v932
        %v1047 = vunpack.c.l.b16 %v933
        %v1048 = vunpack.c.l.b16 %v934
        %v1049 = vunpack.c.l.b16 %v935
        %v1050 = vunpack.c.l.b16 %v936
        %v1051 = vunpack.c.l.b16 %v937
        %v1052 = vunpack.c.l.b16 %v938
        %v1053 = vunpack.c.l.b16 %v939
        %v1054 = vunpack.c.l.b16 %v940
        %v1055 = vunpack.c.l.b16 %v941
        %v1056 = vunpack.c.l.b16 %v942
        %v1057 = vunpack.c.l.b16 %v943
        %v1058 = vpack.c.b16 %v1011, %v1010
        %v1059 = vpack.c.b16 %v1013, %v1012
        %v1060 = vpack.c.b16 %v1015, %v1014
        %v1061 = vpack.c.b16 %v1017, %v1016
        %v1062 = vpack.c.b16 %v1019, %v1018
        %v1063 = vpack.c.b16 %v1021, %v1020
        %v1064 = vpack.c.b16 %v1023, %v1022
        %v1065 = vpack.c.b16 %v1025, %v1024
        %v1066 = vpack.c.b16 %v1027, %v1026
        %v1067 = vpack.c.b16 %v1029, %v1028
        %v1068 = vpack.c.b16 %v1031, %v1030
        %v1069 = vpack.c.b16 %v1033, %v1032
        %v1070 = vpack.c.b16 %v1035, %v1034
        %v1071 = vpack.c.b16 %v1037, %v1036
        %v1072 = vpack.c.b16 %v1039, %v1038
        %v1073 = vpack.c.b16 %v1041, %v1040
        %v1074 = vpack.c.b16 %v1043, %v1042
        %v1075 = vpack.c.b16 %v1045, %v1044
        %v1076 = vpack.c.b16 %v1047, %v1046
        %v1077 = vpack.c.b16 %v1049, %v1048
        %v1078 = vpack.c.b16 %v1051, %v1050
        %v1079 = vpack.c.b16 %v1053, %v1052
        %v1080 = vpack.c.b16 %v1055, %v1054
        %v1081 = vpack.c.b16 %v1057, %v1056
        %1106 = vmatprep.subr.bf16.mxu0 0
        %1107 = vmatpush1.bf16.msra.mxu0 %v1065
        %1108 = vmatprep.subr.bf16.mxu0 0
        %1109 = vmatpush1.bf16.msra.mxu0 %v1064
        %1110 = vmatprep.subr.bf16.mxu0 0
        %1111 = vmatpush1.bf16.msra.mxu0 %v1063
        %1112 = vmatprep.subr.bf16.mxu0 0
        %1113 = vmatpush1.bf16.msra.mxu0 %v1062
        %1114 = vmatprep.subr.bf16.mxu0 0
        %1115 = vmatpush1.bf16.msra.mxu0 %v1061
        %1116 = vmatprep.subr.bf16.mxu0 0
        %1117 = vmatpush1.bf16.msra.mxu0 %v1060
        %1118 = vmatprep.subr.bf16.mxu0 0
        %1119 = vmatpush1.bf16.msra.mxu0 %v1059
        %1120 = vmatprep.subr.bf16.mxu0 0
        %1121 = vmatpush1.bf16.msra.mxu0 %v1058
        %1122 = vmatprep.subr.bf16.mxu0 0
        %1123 = vmatpush2.bf16.msra.mxu0 %v1073
        %1124 = vmatprep.subr.bf16.mxu0 0
        %1125 = vmatpush2.bf16.msra.mxu0 %v1072
        %1126 = vmatprep.subr.bf16.mxu0 0
        %1127 = vmatpush2.bf16.msra.mxu0 %v1071
        %1128 = vmatprep.subr.bf16.mxu0 0
        %1129 = vmatpush2.bf16.msra.mxu0 %v1070
        %1130 = vmatprep.subr.bf16.mxu0 0
        %1131 = vmatpush2.bf16.msra.mxu0 %v1069
        %1132 = vmatprep.subr.bf16.mxu0 0
        %1133 = vmatpush2.bf16.msra.mxu0 %v1068
        %1134 = vmatprep.subr.bf16.mxu0 0
        %1135 = vmatpush2.bf16.msra.mxu0 %v1067
        %1136 = vmatprep.subr.bf16.mxu0 0
        %1137 = vmatpush2.bf16.msra.mxu0 %v1066
        %1138 = vmatprep.mubr.bf16.mxu0 %v957
        %1139 = vmatmul.mubr.bf16.gmra.mxu0 %v956
        %v1140 = vpop.f32.mrf.mxu0
        %v1141 = vadd.f32 %v949, %v1140
        %v1142 = vpop.f32.mrf.mxu0
        %v1143 = vpop.f32.mrf.mxu0
        %v1144 = vpop.f32.mrf.mxu0
        %1145 = vdwg.mxu0
        %1146 = vmatprep.subr.bf16.mxu0 0
        %1147 = vmatpush1.bf16.msra.mxu0 %v1081
        %1148 = vmatprep.subr.bf16.mxu0 0
        %1149 = vmatpush1.bf16.msra.mxu0 %v1080
        %1150 = vmatprep.subr.bf16.mxu0 0
        %1151 = vmatpush1.bf16.msra.mxu0 %v1079
        %1152 = vmatprep.subr.bf16.mxu0 0
        %1153 = vmatpush1.bf16.msra.mxu0 %v1078
        %1154 = vmatprep.subr.bf16.mxu0 0
        %1155 = vmatpush1.bf16.msra.mxu0 %v1077
        %1156 = vmatprep.subr.bf16.mxu0 0
        %1157 = vmatpush1.bf16.msra.mxu0 %v1076
        %1158 = vmatprep.subr.bf16.mxu0 0
        %1159 = vmatpush1.bf16.msra.mxu0 %v1075
        %1160 = vmatprep.subr.bf16.mxu0 0
        %1161 = vmatpush1.bf16.msra.mxu0 %v1074
        %1162 = vmatprep.subr.bf16.mxu0 0
        %1163 = vmatpush2.bf16.msra.mxu0 0
        %1164 = vmatprep.subr.bf16.mxu0 0
        %1165 = vmatpush2.bf16.msra.mxu0 0
        %1166 = vmatprep.subr.bf16.mxu0 0
        %1167 = vmatpush2.bf16.msra.mxu0 0
        %1168 = vmatprep.subr.bf16.mxu0 0
        %1169 = vmatpush2.bf16.msra.mxu0 0
        %1170 = vmatprep.subr.bf16.mxu0 0
        %1171 = vmatpush2.bf16.msra.mxu0 0
        %1172 = vmatprep.subr.bf16.mxu0 0
        %1173 = vmatpush2.bf16.msra.mxu0 0
        %1174 = vmatprep.subr.bf16.mxu0 0
        %1175 = vmatpush2.bf16.msra.mxu0 0
        %1176 = vmatprep.subr.bf16.mxu0 0
        %1177 = vmatpush2.bf16.msra.mxu0 0
        %1178 = vmatprep.mubr.bf16.mxu0 0
        %1179 = vmatmul.mubr.bf16.gmra.mxu0 %v958
        %v1180 = vpop.f32.mrf.mxu0
        %v1181 = vadd.f32 %v1141, %v1180
        %v1182 = vpop.f32.mrf.mxu0
        %v1183 = vpop.f32.mrf.mxu0
        %v1184 = vpop.f32.mrf.mxu0
        %1185 = vdwg.mxu0
        %v1186 = vmax.f32 %v1181, 0.0
        %1187 = vst.msk [vmem:[#allocation3 + $0x1] sm:$0xf] %vm548, %v1186
        %vm1188 = vcmask 785412
        %1189 = vst.msk [vmem:[#allocation3 + $0x3] sm:$0xf0] %vm1188, %v1186
        %v1190 = vld [vmem:[#allocation3] ss:$2 sm:$0x3]
        %v1191 = vpack.c.bf16 %v1190, %v1190
        %vm1192 = vcmask 778240
        %1193 = vst.msk [vmem:[#allocation7] sm:$0x1] %vm1192, %v1191
        %s1194 = scalar_lea.vmem [#allocation3], 1
        %v1195 = vld [vmem:[%s1194] ss:$2 sm:$0x3]
        %v1196 = vpack.c.bf16 %v1195, %v1195
        %v1199 = vunpack.c.l.s4 1983009808
        %v1200 = vunpack.c.0.s8 %v1199
        %v1201 = vlaneseq
        %v1202 = vshrl.u32 %v1201, 7
        %v1203 = vsub.s32 %v1200, %v1202
        %v1204 = vrot.slane %v1196, %v1203
        %1205 = vrot.lane.b32.xlu0 %v1204, 96
        %v1206 = vpop.permute.xlu0 %1205
        %v1207 = vrot.slane %v1206, 6
        %v1208 = vsel %vm577, %v1207, %v1206
        %vm1210 = vcmask 1041152
        %vm1211 = vcmask 518146
        %vm1212 = vmor %vm1211, %vm1210
        %1213 = vst.msk [vmem:[#allocation7] sm:$0x5] %vm1212, %v1208
        %s1214 = scalar_lea.vmem [#allocation3], 2
        %v1215 = vld [vmem:[%s1214] ss:$2 sm:$0x3]
        %v1216 = vpack.c.bf16 %v1215, %v1215
        %v1219 = vunpack.c.l.s4 1983009808
        %v1220 = vunpack.c.0.s8 %v1219
        %v1221 = vlaneseq
        %v1222 = vshrl.u32 %v1221, 7
        %v1223 = vsub.s32 %v1220, %v1222
        %v1224 = vrot.slane %v1216, %v1223
        %1225 = vrot.lane.b32.xlu0 %v1224, 64
        %v1226 = vpop.permute.xlu0 %1225
        %v1227 = vrot.slane %v1226, 6
        %v1228 = vsel %vm822, %v1227, %v1226
        %vm1230 = vcmask 1040896
        %vm1231 = vcmask 256002
        %vm1232 = vmor %vm1231, %vm1230
        %1233 = vst.msk [vmem:[#allocation7 + $0x2] sm:$0x5] %vm1232, %v1228
        %s1234 = scalar_lea.vmem [#allocation3], 3
        %v1235 = vld [vmem:[%s1234] ss:$2 sm:$0x3]
        %v1236 = vpack.c.bf16 %v1235, %v1235
        %v1239 = vunpack.c.l.s4 1983009808
        %v1240 = vunpack.c.0.s8 %v1239
        %v1241 = vlaneseq
        %v1242 = vshrl.u32 %v1241, 7
        %v1243 = vsub.s32 %v1240, %v1242
        %v1244 = vrot.slane %v1236, %v1243
        %1245 = vrot.lane.b32.xlu0 %v1244, 32
        %v1246 = vpop.permute.xlu0 %1245
        %vm1248 = vcmask 1040640
        %1249 = vst.msk [vmem:[#allocation7 + $0x4] sm:$0x1] %vm1248, %v1246
        %s1250 = scalar_lea.vmem [#allocation3], 6
        %v1251 = vld [vmem:[%s1250] ss:$2 sm:$0x3]
        %v1252 = vpack.c.bf16 %v1251, %v1251
        %v1255 = vunpack.c.l.s4 1983009808
        %v1256 = vunpack.c.0.s8 %v1255
        %v1257 = vlaneseq
        %v1258 = vshrl.u32 %v1257, 7
        %v1259 = vsub.s32 %v1256, %v1258
        %v1260 = vrot.slane %v1252, %v1259
        %v1261 = vrot.slane %v1260, 7
        %vm1263 = vcmask 779265
        %1264 = vst.msk [vmem:[#allocation7] sm:$0x2] %vm1263, %v1261
        %s1265 = scalar_lea.vmem [#allocation3], 7
        %v1266 = vld [vmem:[%s1265] ss:$2 sm:$0x3]
        %v1267 = vpack.c.bf16 %v1266, %v1266
        %v1270 = vunpack.c.l.s4 1983009808
        %v1271 = vunpack.c.0.s8 %v1270
        %v1272 = vlaneseq
        %v1273 = vshrl.u32 %v1272, 7
        %v1274 = vsub.s32 %v1271, %v1273
        %v1275 = vrot.slane %v1267, %v1274
        %v1276 = vrot.slane %v1275, 7
        %1277 = vrot.lane.b32.xlu0 %v1276, 96
        %v1278 = vpop.permute.xlu0 %1277
        %v1279 = vrot.slane %v1278, 6
        %v1280 = vsel %vm577, %v1279, %v1278
        %vm1282 = vcmask 1042177
        %vm1283 = vcmask 519171
        %vm1284 = vmor %vm1283, %vm1282
        %1285 = vst.msk [vmem:[#allocation7] sm:$0xa] %vm1284, %v1280
        %s1286 = scalar_lea.vmem [#allocation3], 8
        %v1287 = vld [vmem:[%s1286] ss:$2 sm:$0x3]
        %v1288 = vpack.c.bf16 %v1287, %v1287
        %v1291 = vunpack.c.l.s4 1983009808
        %v1292 = vunpack.c.0.s8 %v1291
        %v1293 = vlaneseq
        %v1294 = vshrl.u32 %v1293, 7
        %v1295 = vsub.s32 %v1292, %v1294
        %v1296 = vrot.slane %v1288, %v1295
        %v1297 = vrot.slane %v1296, 7
        %1298 = vrot.lane.b32.xlu0 %v1297, 64
        %v1299 = vpop.permute.xlu0 %1298
        %v1300 = vrot.slane %v1299, 6
        %v1301 = vsel %vm822, %v1300, %v1299
        %vm1303 = vcmask 1041921
        %vm1304 = vcmask 257027
        %vm1305 = vmor %vm1304, %vm1303
        %1306 = vst.msk [vmem:[#allocation7 + $0x2] sm:$0xa] %vm1305, %v1301
        %s1307 = scalar_lea.vmem [#allocation3], 9
        %v1308 = vld [vmem:[%s1307] ss:$2 sm:$0x3]
        %v1309 = vpack.c.bf16 %v1308, %v1308
        %v1312 = vunpack.c.l.s4 1983009808
        %v1313 = vunpack.c.0.s8 %v1312
        %v1314 = vlaneseq
        %v1315 = vshrl.u32 %v1314, 7
        %v1316 = vsub.s32 %v1313, %v1315
        %v1317 = vrot.slane %v1309, %v1316
        %v1318 = vrot.slane %v1317, 7
        %1319 = vrot.lane.b32.xlu0 %v1318, 32
        %v1320 = vpop.permute.xlu0 %1319
        %vm1322 = vcmask 1041665
        %1323 = vst.msk [vmem:[#allocation7 + $0x4] sm:$0x2] %vm1322, %v1320
        %v1324 = vld [vmem:[#allocation7] sm:$0x3f]
        %v1325 = vld [vmem:[%s437] sm:$0xf]
        %v1326 = vld [vmem:[%s437 + $0x4] sm:$0xf]
        %v1327 = vld [vmem:[%s437 + $0x8] sm:$0xf]
        %v1328 = vld [vmem:[%s437 + $0xc] sm:$0xf]
        %v1329 = vld [vmem:[%s437 + $0x10] sm:$0xf]
        %v1330 = vld [vmem:[%s437 + $0x14] sm:$0xf]
        %v1331 = vld [vmem:[%s437 + $0x18] sm:$0xf]
        %v1332 = vld [vmem:[%s437 + $0x1c] sm:$0xf]
        %v1333 = vld [vmem:[%s437 + $0x20] sm:$0xf]
        %v1334 = vld [vmem:[%s437 + $0x24] sm:$0xf]
        %v1335 = vld [vmem:[%s437 + $0x28] sm:$0xf]
        %v1336 = vld [vmem:[%s437 + $0x2c] sm:$0xf]
        %v1337 = vld [vmem:[%s437 + $0x30] sm:$0xf]
        %v1338 = vld [vmem:[%s437 + $0x34] sm:$0xf]
        %v1339 = vld [vmem:[%s437 + $0x38] sm:$0xf]
        %v1340 = vld [vmem:[%s437 + $0x3c] sm:$0xf]
        %v1341 = vld [vmem:[%s437 + $0x40] sm:$0xf]
        %v1342 = vld [vmem:[%s437 + $0x44] sm:$0xf]
        %v1343 = vld [vmem:[%s437 + $0x48] sm:$0xf]
        %v1344 = vld [vmem:[%s437 + $0x4c] sm:$0xf]
        %v1345 = vld [vmem:[%s437 + $0x50] sm:$0xf]
        %v1346 = vld [vmem:[%s437 + $0x54] sm:$0xf]
        %v1347 = vld [vmem:[%s437 + $0x58] sm:$0xf]
        %v1348 = vld [vmem:[%s437 + $0x5c] sm:$0xf]
        %v1349 = vld [vmem:[%s437 + $0x60] sm:$0xf]
        %v1350 = vld [vmem:[%s437 + $0x64] sm:$0xf]
        %v1351 = vld [vmem:[%s437 + $0x68] sm:$0xf]
        %v1352 = vld [vmem:[%s437 + $0x6c] sm:$0xf]
        %v1353 = vld [vmem:[%s437 + $0x70] sm:$0xf]
        %v1354 = vld [vmem:[%s437 + $0x74] sm:$0xf]
        %v1355 = vld [vmem:[%s437 + $0x78] sm:$0xf]
        %v1356 = vld [vmem:[%s437 + $0x7c] sm:$0xf]
        %v1357 = vld [vmem:[%s437 + $0x80] sm:$0xf]
        %v1358 = vld [vmem:[%s437 + $0x84] sm:$0xf]
        %v1359 = vld [vmem:[%s437 + $0x88] sm:$0xf]
        %v1360 = vld [vmem:[%s437 + $0x8c] sm:$0xf]
        %v1361 = vld [vmem:[%s437 + $0x90] sm:$0xf]
        %v1362 = vld [vmem:[%s437 + $0x94] sm:$0xf]
        %v1363 = vld [vmem:[%s437 + $0x98] sm:$0xf]
        %v1364 = vld [vmem:[%s437 + $0x9c] sm:$0xf]
        %v1365 = vld [vmem:[%s437 + $0xa0] sm:$0xf]
        %v1366 = vld [vmem:[%s437 + $0xa4] sm:$0xf]
        %v1367 = vld [vmem:[%s437 + $0xa8] sm:$0xf]
        %v1368 = vld [vmem:[%s437 + $0xac] sm:$0xf]
        %v1369 = vld [vmem:[%s437 + $0xb0] sm:$0xf]
        %v1370 = vld [vmem:[%s437 + $0xb4] sm:$0xf]
        %v1371 = vld [vmem:[%s437 + $0xb8] sm:$0xf]
        %v1372 = vld [vmem:[%s437 + $0xbc] sm:$0xf]
        %v1373 = vld [vmem:[%s533] sm:$0x1]
        %v1375 = vlaneseq
        %v1376 = vshrl.u32 %v1375, 7
        %v1377 = vsub.s32 0, %v1376
        %v1378 = vrot.slane %v1373, %v1377
        %v1381 = vcombine.high %v1324, %v1324
        %v1383 = vunpack.c.l.s4 1983009808
        %v1384 = vunpack.c.0.s8 %v1383
        %v1385 = vlaneseq
        %v1386 = vshrl.u32 %v1385, 7
        %v1387 = vsub.s32 %v1384, %v1386
        %v1388 = vrot.slane %v1324, %v1387
        %v1390 = vunpack.c.l.s4 1983009808
        %v1391 = vunpack.c.0.s8 %v1390
        %v1392 = vlaneseq
        %v1393 = vshrl.u32 %v1392, 7
        %v1394 = vsub.s32 %v1391, %v1393
        %v1395 = vrot.slane %v1381, %v1394
        %v1396 = vcombine.high %v1388, %v1388
        %v1448 = vunpack.c.l.b16 %v1325
        %v1449 = vunpack.c.l.b16 %v1326
        %v1450 = vunpack.c.l.b16 %v1327
        %v1451 = vunpack.c.l.b16 %v1328
        %v1452 = vunpack.c.l.b16 %v1329
        %v1453 = vunpack.c.l.b16 %v1330
        %v1454 = vunpack.c.l.b16 %v1331
        %v1455 = vunpack.c.l.b16 %v1332
        %v1456 = vunpack.c.l.b16 %v1333
        %v1457 = vunpack.c.l.b16 %v1334
        %v1458 = vunpack.c.l.b16 %v1335
        %v1459 = vunpack.c.l.b16 %v1336
        %v1460 = vunpack.c.l.b16 %v1337
        %v1461 = vunpack.c.l.b16 %v1338
        %v1462 = vunpack.c.l.b16 %v1339
        %v1463 = vunpack.c.l.b16 %v1340
        %v1464 = vunpack.c.l.b16 %v1341
        %v1465 = vunpack.c.l.b16 %v1342
        %v1466 = vunpack.c.l.b16 %v1343
        %v1467 = vunpack.c.l.b16 %v1344
        %v1468 = vunpack.c.l.b16 %v1345
        %v1469 = vunpack.c.l.b16 %v1346
        %v1470 = vunpack.c.l.b16 %v1347
        %v1471 = vunpack.c.l.b16 %v1348
        %v1472 = vunpack.c.l.b16 %v1349
        %v1473 = vunpack.c.l.b16 %v1350
        %v1474 = vunpack.c.l.b16 %v1351
        %v1475 = vunpack.c.l.b16 %v1352
        %v1476 = vunpack.c.l.b16 %v1353
        %v1477 = vunpack.c.l.b16 %v1354
        %v1478 = vunpack.c.l.b16 %v1355
        %v1479 = vunpack.c.l.b16 %v1356
        %v1480 = vunpack.c.l.b16 %v1357
        %v1481 = vunpack.c.l.b16 %v1358
        %v1482 = vunpack.c.l.b16 %v1359
        %v1483 = vunpack.c.l.b16 %v1360
        %v1484 = vunpack.c.l.b16 %v1361
        %v1485 = vunpack.c.l.b16 %v1362
        %v1486 = vunpack.c.l.b16 %v1363
        %v1487 = vunpack.c.l.b16 %v1364
        %v1488 = vunpack.c.l.b16 %v1365
        %v1489 = vunpack.c.l.b16 %v1366
        %v1490 = vunpack.c.l.b16 %v1367
        %v1491 = vunpack.c.l.b16 %v1368
        %v1492 = vunpack.c.l.b16 %v1369
        %v1493 = vunpack.c.l.b16 %v1370
        %v1494 = vunpack.c.l.b16 %v1371
        %v1495 = vunpack.c.l.b16 %v1372
        %v1496 = vpack.c.b16 %v1449, %v1448
        %v1497 = vpack.c.b16 %v1451, %v1450
        %v1498 = vpack.c.b16 %v1453, %v1452
        %v1499 = vpack.c.b16 %v1455, %v1454
        %v1500 = vpack.c.b16 %v1457, %v1456
        %v1501 = vpack.c.b16 %v1459, %v1458
        %v1502 = vpack.c.b16 %v1461, %v1460
        %v1503 = vpack.c.b16 %v1463, %v1462
        %v1504 = vpack.c.b16 %v1465, %v1464
        %v1505 = vpack.c.b16 %v1467, %v1466
        %v1506 = vpack.c.b16 %v1469, %v1468
        %v1507 = vpack.c.b16 %v1471, %v1470
        %v1508 = vpack.c.b16 %v1473, %v1472
        %v1509 = vpack.c.b16 %v1475, %v1474
        %v1510 = vpack.c.b16 %v1477, %v1476
        %v1511 = vpack.c.b16 %v1479, %v1478
        %v1512 = vpack.c.b16 %v1481, %v1480
        %v1513 = vpack.c.b16 %v1483, %v1482
        %v1514 = vpack.c.b16 %v1485, %v1484
        %v1515 = vpack.c.b16 %v1487, %v1486
        %v1516 = vpack.c.b16 %v1489, %v1488
        %v1517 = vpack.c.b16 %v1491, %v1490
        %v1518 = vpack.c.b16 %v1493, %v1492
        %v1519 = vpack.c.b16 %v1495, %v1494
        %1544 = vmatprep.subr.bf16.mxu0 0
        %1545 = vmatpush1.bf16.msra.mxu0 %v1503
        %1546 = vmatprep.subr.bf16.mxu0 0
        %1547 = vmatpush1.bf16.msra.mxu0 %v1502
        %1548 = vmatprep.subr.bf16.mxu0 0
        %1549 = vmatpush1.bf16.msra.mxu0 %v1501
        %1550 = vmatprep.subr.bf16.mxu0 0
        %1551 = vmatpush1.bf16.msra.mxu0 %v1500
        %1552 = vmatprep.subr.bf16.mxu0 0
        %1553 = vmatpush1.bf16.msra.mxu0 %v1499
        %1554 = vmatprep.subr.bf16.mxu0 0
        %1555 = vmatpush1.bf16.msra.mxu0 %v1498
        %1556 = vmatprep.subr.bf16.mxu0 0
        %1557 = vmatpush1.bf16.msra.mxu0 %v1497
        %1558 = vmatprep.subr.bf16.mxu0 0
        %1559 = vmatpush1.bf16.msra.mxu0 %v1496
        %1560 = vmatprep.subr.bf16.mxu0 0
        %1561 = vmatpush2.bf16.msra.mxu0 %v1511
        %1562 = vmatprep.subr.bf16.mxu0 0
        %1563 = vmatpush2.bf16.msra.mxu0 %v1510
        %1564 = vmatprep.subr.bf16.mxu0 0
        %1565 = vmatpush2.bf16.msra.mxu0 %v1509
        %1566 = vmatprep.subr.bf16.mxu0 0
        %1567 = vmatpush2.bf16.msra.mxu0 %v1508
        %1568 = vmatprep.subr.bf16.mxu0 0
        %1569 = vmatpush2.bf16.msra.mxu0 %v1507
        %1570 = vmatprep.subr.bf16.mxu0 0
        %1571 = vmatpush2.bf16.msra.mxu0 %v1506
        %1572 = vmatprep.subr.bf16.mxu0 0
        %1573 = vmatpush2.bf16.msra.mxu0 %v1505
        %1574 = vmatprep.subr.bf16.mxu0 0
        %1575 = vmatpush2.bf16.msra.mxu0 %v1504
        %1576 = vmatprep.mubr.bf16.mxu0 %v1396
        %1577 = vmatmul.mubr.bf16.gmra.mxu0 %v1388
        %v1578 = vpop.f32.mrf.mxu0
        %v1579 = vadd.f32 %v1378, %v1578
        %v1580 = vpop.f32.mrf.mxu0
        %v1581 = vpop.f32.mrf.mxu0
        %v1582 = vpop.f32.mrf.mxu0
        %1583 = vdwg.mxu0
        %1584 = vmatprep.subr.bf16.mxu0 0
        %1585 = vmatpush1.bf16.msra.mxu0 %v1519
        %1586 = vmatprep.subr.bf16.mxu0 0
        %1587 = vmatpush1.bf16.msra.mxu0 %v1518
        %1588 = vmatprep.subr.bf16.mxu0 0
        %1589 = vmatpush1.bf16.msra.mxu0 %v1517
        %1590 = vmatprep.subr.bf16.mxu0 0
        %1591 = vmatpush1.bf16.msra.mxu0 %v1516
        %1592 = vmatprep.subr.bf16.mxu0 0
        %1593 = vmatpush1.bf16.msra.mxu0 %v1515
        %1594 = vmatprep.subr.bf16.mxu0 0
        %1595 = vmatpush1.bf16.msra.mxu0 %v1514
        %1596 = vmatprep.subr.bf16.mxu0 0
        %1597 = vmatpush1.bf16.msra.mxu0 %v1513
        %1598 = vmatprep.subr.bf16.mxu0 0
        %1599 = vmatpush1.bf16.msra.mxu0 %v1512
        %1600 = vmatprep.subr.bf16.mxu0 0
        %1601 = vmatpush2.bf16.msra.mxu0 0
        %1602 = vmatprep.subr.bf16.mxu0 0
        %1603 = vmatpush2.bf16.msra.mxu0 0
        %1604 = vmatprep.subr.bf16.mxu0 0
        %1605 = vmatpush2.bf16.msra.mxu0 0
        %1606 = vmatprep.subr.bf16.mxu0 0
        %1607 = vmatpush2.bf16.msra.mxu0 0
        %1608 = vmatprep.subr.bf16.mxu0 0
        %1609 = vmatpush2.bf16.msra.mxu0 0
        %1610 = vmatprep.subr.bf16.mxu0 0
        %1611 = vmatpush2.bf16.msra.mxu0 0
        %1612 = vmatprep.subr.bf16.mxu0 0
        %1613 = vmatpush2.bf16.msra.mxu0 0
        %1614 = vmatprep.subr.bf16.mxu0 0
        %1615 = vmatpush2.bf16.msra.mxu0 0
        %1616 = vmatprep.mubr.bf16.mxu0 0
        %1617 = vmatmul.mubr.bf16.gmra.mxu0 %v1395
        %v1618 = vpop.f32.mrf.mxu0
        %v1619 = vadd.f32 %v1579, %v1618
        %v1620 = vpop.f32.mrf.mxu0
        %v1621 = vpop.f32.mrf.mxu0
        %v1622 = vpop.f32.mrf.mxu0
        %1623 = vdwg.mxu0
        %v1624 = vmax.f32 %v1619, 0.0
        %1625 = vst.msk [vmem:[#allocation4 + $0x1] sm:$0x3] %vm796, %v1624
        %1626 = vst.msk [vmem:[#allocation4 + $0x3] sm:$0xc] %vm848, %v1624
        %v1627 = vld [vmem:[#allocation4] ss:$2 sm:$0x1]
        %v1628 = vpack.c.bf16 %v1627, %v1627
        %vm1629 = vcmask 778240
        %vm1630 = vsmask.f32 256
        %vm1631 = vmand %vm1629, %vm1630
        %v1632 = vld [vmem:[#allocation8] sm:$0x1]
        %v1633 = vsel %vm1631, %v1628, %v1632
        %1634 = vst [vmem:[#allocation8] sm:$0x1] %v1633
        %s1635 = scalar_lea.vmem [#allocation4], 1
        %v1636 = vld [vmem:[%s1635] ss:$2 sm:$0x1]
        %v1637 = vpack.c.bf16 %v1636, %v1636
        %v1640 = vunpack.c.l.s4 1966171168
        %v1641 = vunpack.c.0.s8 %v1640
        %v1642 = vlaneseq
        %v1643 = vshrl.u32 %v1642, 7
        %v1644 = vsub.s32 %v1641, %v1643
        %v1645 = vrot.slane %v1637, %v1644
        %v1647 = vunpack.c.l.s4 1966171168
        %v1648 = vunpack.c.0.s8 %v1647
        %v1649 = vlaneseq
        %v1650 = vshrl.u32 %v1649, 7
        %v1651 = vsub.s32 %v1648, %v1650
        %v1652 = vrot.slane %v1645, %v1651
        %1653 = vrot.lane.b32.xlu0 %v1652, 96
        %v1654 = vpop.permute.xlu0 %1653
        %v1655 = vrot.slane %v1654, 7
        %v1656 = vsel %vm577, %v1655, %v1654
        %vm1658 = vcmask 1041152
        %vm1659 = vmand %vm1658, %vm1630
        %vm1660 = vcmask 517121
        %vm1661 = vsmask.f32 1280
        %vm1662 = vmand %vm1660, %vm1661
        %vm1663 = vmor %vm1662, %vm1659
        %v1664 = vld [vmem:[#allocation8] sm:$0x3]
        %v1665 = vsel %vm1663, %v1656, %v1664
        %1666 = vst [vmem:[#allocation8] sm:$0x3] %v1665
        %s1667 = scalar_lea.vmem [#allocation4], 2
        %v1668 = vld [vmem:[%s1667] ss:$2 sm:$0x1]
        %v1669 = vpack.c.bf16 %v1668, %v1668
        %v1672 = vunpack.c.l.s4 1966171168
        %v1673 = vunpack.c.0.s8 %v1672
        %v1674 = vlaneseq
        %v1675 = vshrl.u32 %v1674, 7
        %v1676 = vsub.s32 %v1673, %v1675
        %v1677 = vrot.slane %v1669, %v1676
        %v1679 = vunpack.c.l.s4 1966171168
        %v1680 = vunpack.c.0.s8 %v1679
        %v1681 = vlaneseq
        %v1682 = vshrl.u32 %v1681, 7
        %v1683 = vsub.s32 %v1680, %v1682
        %v1684 = vrot.slane %v1677, %v1683
        %1685 = vrot.lane.b32.xlu0 %v1684, 64
        %v1686 = vpop.permute.xlu0 %1685
        %v1687 = vrot.slane %v1686, 7
        %v1688 = vsel %vm822, %v1687, %v1686
        %vm1690 = vcmask 1040896
        %vm1691 = vmand %vm1690, %vm1630
        %vm1692 = vcmask 254977
        %vm1693 = vmand %vm1692, %vm1661
        %vm1694 = vmor %vm1693, %vm1691
        %v1695 = vld [vmem:[#allocation8 + $0x1] sm:$0x3]
        %v1696 = vsel %vm1694, %v1688, %v1695
        %1697 = vst [vmem:[#allocation8 + $0x1] sm:$0x3] %v1696
        %s1698 = scalar_lea.vmem [#allocation4], 3
        %v1699 = vld [vmem:[%s1698] ss:$2 sm:$0x1]
        %v1700 = vpack.c.bf16 %v1699, %v1699
        %v1703 = vunpack.c.l.s4 1966171168
        %v1704 = vunpack.c.0.s8 %v1703
        %v1705 = vlaneseq
        %v1706 = vshrl.u32 %v1705, 7
        %v1707 = vsub.s32 %v1704, %v1706
        %v1708 = vrot.slane %v1700, %v1707
        %v1710 = vunpack.c.l.s4 1966171168
        %v1711 = vunpack.c.0.s8 %v1710
        %v1712 = vlaneseq
        %v1713 = vshrl.u32 %v1712, 7
        %v1714 = vsub.s32 %v1711, %v1713
        %v1715 = vrot.slane %v1708, %v1714
        %1716 = vrot.lane.b32.xlu0 %v1715, 32
        %v1717 = vpop.permute.xlu0 %1716
        %vm1719 = vcmask 1040640
        %vm1720 = vmand %vm1719, %vm1630
        %v1721 = vld [vmem:[#allocation8 + $0x2] sm:$0x1]
        %v1722 = vsel %vm1720, %v1717, %v1721
        %1723 = vst [vmem:[#allocation8 + $0x2] sm:$0x1] %v1722
        %s1724 = scalar_lea.vmem [#allocation4], 4
        %v1725 = vld [vmem:[%s1724] ss:$2 sm:$0x1]
        %v1726 = vpack.c.bf16 %v1725, %v1725
        %v1729 = vunpack.c.l.s4 1966171168
        %v1730 = vunpack.c.0.s8 %v1729
        %v1731 = vlaneseq
        %v1732 = vshrl.u32 %v1731, 7
        %v1733 = vsub.s32 %v1730, %v1732
        %v1734 = vrot.slane %v1726, %v1733
        %v1736 = vunpack.c.l.s4 1966171168
        %v1737 = vunpack.c.0.s8 %v1736
        %v1738 = vlaneseq
        %v1739 = vshrl.u32 %v1738, 7
        %v1740 = vsub.s32 %v1737, %v1739
        %v1741 = vrot.slane %v1734, %v1740
        %v1743 = vshll.u32 %v1741, 16
        %vm1746 = vsmask.f32 7938
        %vm1747 = vmand %vm1629, %vm1746
        %v1748 = vld [vmem:[#allocation8] sm:$0x1]
        %v1749 = vsel %vm1747, %v1743, %v1748
        %1750 = vst [vmem:[#allocation8] sm:$0x1] %v1749
        %s1751 = scalar_lea.vmem [#allocation4], 5
        %v1752 = vld [vmem:[%s1751] ss:$2 sm:$0x1]
        %v1753 = vpack.c.bf16 %v1752, %v1752
        %v1756 = vunpack.c.l.s4 1966171168
        %v1757 = vunpack.c.0.s8 %v1756
        %v1758 = vlaneseq
        %v1759 = vshrl.u32 %v1758, 7
        %v1760 = vsub.s32 %v1757, %v1759
        %v1761 = vrot.slane %v1753, %v1760
        %v1763 = vunpack.c.l.s4 1966171168
        %v1764 = vunpack.c.0.s8 %v1763
        %v1765 = vlaneseq
        %v1766 = vshrl.u32 %v1765, 7
        %v1767 = vsub.s32 %v1764, %v1766
        %v1768 = vrot.slane %v1761, %v1767
        %v1770 = vshll.u32 %v1768, 16
        %1772 = vrot.lane.b32.xlu0 %v1770, 96
        %v1773 = vpop.permute.xlu0 %1772
        %v1774 = vrot.slane %v1773, 7
        %v1775 = vsel %vm577, %v1774, %v1773
        %vm1777 = vmand %vm1658, %vm1746
        %vm1778 = vsmask.f32 7942
        %vm1779 = vmand %vm1660, %vm1778
        %vm1780 = vmor %vm1779, %vm1777
        %v1781 = vld [vmem:[#allocation8] sm:$0x3]
        %v1782 = vsel %vm1780, %v1775, %v1781
        %1783 = vst [vmem:[#allocation8] sm:$0x3] %v1782
        %s1784 = scalar_lea.vmem [#allocation4], 6
        %v1785 = vld [vmem:[%s1784] ss:$2 sm:$0x1]
        %v1786 = vpack.c.bf16 %v1785, %v1785
        %v1789 = vunpack.c.l.s4 1966171168
        %v1790 = vunpack.c.0.s8 %v1789
        %v1791 = vlaneseq
        %v1792 = vshrl.u32 %v1791, 7
        %v1793 = vsub.s32 %v1790, %v1792
        %v1794 = vrot.slane %v1786, %v1793
        %v1796 = vunpack.c.l.s4 1966171168
        %v1797 = vunpack.c.0.s8 %v1796
        %v1798 = vlaneseq
        %v1799 = vshrl.u32 %v1798, 7
        %v1800 = vsub.s32 %v1797, %v1799
        %v1801 = vrot.slane %v1794, %v1800
        %v1803 = vshll.u32 %v1801, 16
        %1805 = vrot.lane.b32.xlu0 %v1803, 64
        %v1806 = vpop.permute.xlu0 %1805
        %v1807 = vrot.slane %v1806, 7
        %v1808 = vsel %vm822, %v1807, %v1806
        %vm1810 = vmand %vm1690, %vm1746
        %vm1811 = vmand %vm1692, %vm1778
        %vm1812 = vmor %vm1811, %vm1810
        %v1813 = vld [vmem:[#allocation8 + $0x1] sm:$0x3]
        %v1814 = vsel %vm1812, %v1808, %v1813
        %1815 = vst [vmem:[#allocation8 + $0x1] sm:$0x3] %v1814
        %s1816 = scalar_lea.vmem [#allocation4], 7
        %v1817 = vld [vmem:[%s1816] ss:$2 sm:$0x1]
        %v1818 = vpack.c.bf16 %v1817, %v1817
        %v1821 = vunpack.c.l.s4 1966171168
        %v1822 = vunpack.c.0.s8 %v1821
        %v1823 = vlaneseq
        %v1824 = vshrl.u32 %v1823, 7
        %v1825 = vsub.s32 %v1822, %v1824
        %v1826 = vrot.slane %v1818, %v1825
        %v1828 = vunpack.c.l.s4 1966171168
        %v1829 = vunpack.c.0.s8 %v1828
        %v1830 = vlaneseq
        %v1831 = vshrl.u32 %v1830, 7
        %v1832 = vsub.s32 %v1829, %v1831
        %v1833 = vrot.slane %v1826, %v1832
        %v1835 = vshll.u32 %v1833, 16
        %1837 = vrot.lane.b32.xlu0 %v1835, 32
        %v1838 = vpop.permute.xlu0 %1837
        %vm1840 = vmand %vm1719, %vm1746
        %v1841 = vld [vmem:[#allocation8 + $0x2] sm:$0x1]
        %v1842 = vsel %vm1840, %v1838, %v1841
        %1843 = vst [vmem:[#allocation8 + $0x2] sm:$0x1] %v1842
        %v1844 = vld [vmem:[#allocation8] sm:$0x7]
        %v1845 = vld [vmem:[%s446] sm:$0xf]
        %v1846 = vld [vmem:[%s446 + $0x4] sm:$0xf]
        %v1847 = vld [vmem:[%s446 + $0x8] sm:$0xf]
        %v1848 = vld [vmem:[%s446 + $0xc] sm:$0xf]
        %v1849 = vld [vmem:[%s446 + $0x10] sm:$0xf]
        %v1850 = vld [vmem:[%s446 + $0x14] sm:$0xf]
        %v1851 = vld [vmem:[%s446 + $0x18] sm:$0xf]
        %v1852 = vld [vmem:[%s446 + $0x1c] sm:$0xf]
        %v1853 = vld [vmem:[%s446 + $0x20] sm:$0xf]
        %v1854 = vld [vmem:[%s446 + $0x24] sm:$0xf]
        %v1855 = vld [vmem:[%s446 + $0x28] sm:$0xf]
        %v1856 = vld [vmem:[%s446 + $0x2c] sm:$0xf]
        %v1857 = vld [vmem:[%s446 + $0x30] sm:$0xf]
        %v1858 = vld [vmem:[%s446 + $0x34] sm:$0xf]
        %v1859 = vld [vmem:[%s446 + $0x38] sm:$0xf]
        %v1860 = vld [vmem:[%s446 + $0x3c] sm:$0xf]
        %v1861 = vld [vmem:[%s446 + $0x40] sm:$0xf]
        %v1862 = vld [vmem:[%s446 + $0x44] sm:$0xf]
        %v1863 = vld [vmem:[%s446 + $0x48] sm:$0xf]
        %v1864 = vld [vmem:[%s446 + $0x4c] sm:$0xf]
        %v1865 = vld [vmem:[%s446 + $0x50] sm:$0xf]
        %v1866 = vld [vmem:[%s446 + $0x54] sm:$0xf]
        %v1867 = vld [vmem:[%s446 + $0x58] sm:$0xf]
        %v1868 = vld [vmem:[%s446 + $0x5c] sm:$0xf]
        %v1869 = vld [vmem:[%s446 + $0x60] sm:$0xf]
        %v1870 = vld [vmem:[%s446 + $0x64] sm:$0xf]
        %v1871 = vld [vmem:[%s446 + $0x68] sm:$0xf]
        %v1872 = vld [vmem:[%s446 + $0x6c] sm:$0xf]
        %v1873 = vld [vmem:[%s446 + $0x70] sm:$0xf]
        %v1874 = vld [vmem:[%s446 + $0x74] sm:$0xf]
        %v1875 = vld [vmem:[%s446 + $0x78] sm:$0xf]
        %v1876 = vld [vmem:[%s446 + $0x7c] sm:$0xf]
        %v1877 = vld [vmem:[%s446 + $0x80] sm:$0xf]
        %v1878 = vld [vmem:[%s446 + $0x84] sm:$0xf]
        %v1879 = vld [vmem:[%s446 + $0x88] sm:$0xf]
        %v1880 = vld [vmem:[%s446 + $0x8c] sm:$0xf]
        %v1881 = vld [vmem:[%s446 + $0x90] sm:$0xf]
        %v1882 = vld [vmem:[%s446 + $0x94] sm:$0xf]
        %v1883 = vld [vmem:[%s446 + $0x98] sm:$0xf]
        %v1884 = vld [vmem:[%s446 + $0x9c] sm:$0xf]
        %v1885 = vld [vmem:[%s446 + $0xa0] sm:$0xf]
        %v1886 = vld [vmem:[%s446 + $0xa4] sm:$0xf]
        %v1887 = vld [vmem:[%s446 + $0xa8] sm:$0xf]
        %v1888 = vld [vmem:[%s446 + $0xac] sm:$0xf]
        %v1889 = vld [vmem:[%s446 + $0xb0] sm:$0xf]
        %v1890 = vld [vmem:[%s446 + $0xb4] sm:$0xf]
        %v1891 = vld [vmem:[%s446 + $0xb8] sm:$0xf]
        %v1892 = vld [vmem:[%s446 + $0xbc] sm:$0xf]
        %v1893 = vld [vmem:[%s536] sm:$0x1]
        %v1895 = vlaneseq
        %v1896 = vshrl.u32 %v1895, 7
        %v1897 = vsub.s32 0, %v1896
        %v1898 = vrot.slane %v1893, %v1897
        %v1902 = vunpack.c.l.s4 1966171168
        %v1903 = vunpack.c.0.s8 %v1902
        %v1904 = vlaneseq
        %v1905 = vshrl.u32 %v1904, 7
        %v1906 = vsub.s32 %v1903, %v1905
        %v1907 = vrot.slane %v1844, %v1906
        %v1908 = vcombine.high %v1907, %v1907
        %v1910 = vunpack.c.l.s4 1966171168
        %v1911 = vunpack.c.0.s8 %v1910
        %v1912 = vlaneseq
        %v1913 = vshrl.u32 %v1912, 7
        %v1914 = vsub.s32 %v1911, %v1913
        %v1915 = vrot.slane %v1907, %v1914
        %v1917 = vunpack.c.l.s4 1966171168
        %v1918 = vunpack.c.0.s8 %v1917
        %v1919 = vlaneseq
        %v1920 = vshrl.u32 %v1919, 7
        %v1921 = vsub.s32 %v1918, %v1920
        %v1922 = vrot.slane %v1908, %v1921
        %v1923 = vcombine.high %v1915, %v1915
        %v1975 = vunpack.c.l.b16 %v1845
        %v1976 = vunpack.c.l.b16 %v1846
        %v1977 = vunpack.c.l.b16 %v1847
        %v1978 = vunpack.c.l.b16 %v1848
        %v1979 = vunpack.c.l.b16 %v1849
        %v1980 = vunpack.c.l.b16 %v1850
        %v1981 = vunpack.c.l.b16 %v1851
        %v1982 = vunpack.c.l.b16 %v1852
        %v1983 = vunpack.c.l.b16 %v1853
        %v1984 = vunpack.c.l.b16 %v1854
        %v1985 = vunpack.c.l.b16 %v1855
        %v1986 = vunpack.c.l.b16 %v1856
        %v1987 = vunpack.c.l.b16 %v1857
        %v1988 = vunpack.c.l.b16 %v1858
        %v1989 = vunpack.c.l.b16 %v1859
        %v1990 = vunpack.c.l.b16 %v1860
        %v1991 = vunpack.c.l.b16 %v1861
        %v1992 = vunpack.c.l.b16 %v1862
        %v1993 = vunpack.c.l.b16 %v1863
        %v1994 = vunpack.c.l.b16 %v1864
        %v1995 = vunpack.c.l.b16 %v1865
        %v1996 = vunpack.c.l.b16 %v1866
        %v1997 = vunpack.c.l.b16 %v1867
        %v1998 = vunpack.c.l.b16 %v1868
        %v1999 = vunpack.c.l.b16 %v1869
        %v2000 = vunpack.c.l.b16 %v1870
        %v2001 = vunpack.c.l.b16 %v1871
        %v2002 = vunpack.c.l.b16 %v1872
        %v2003 = vunpack.c.l.b16 %v1873
        %v2004 = vunpack.c.l.b16 %v1874
        %v2005 = vunpack.c.l.b16 %v1875
        %v2006 = vunpack.c.l.b16 %v1876
        %v2007 = vunpack.c.l.b16 %v1877
        %v2008 = vunpack.c.l.b16 %v1878
        %v2009 = vunpack.c.l.b16 %v1879
        %v2010 = vunpack.c.l.b16 %v1880
        %v2011 = vunpack.c.l.b16 %v1881
        %v2012 = vunpack.c.l.b16 %v1882
        %v2013 = vunpack.c.l.b16 %v1883
        %v2014 = vunpack.c.l.b16 %v1884
        %v2015 = vunpack.c.l.b16 %v1885
        %v2016 = vunpack.c.l.b16 %v1886
        %v2017 = vunpack.c.l.b16 %v1887
        %v2018 = vunpack.c.l.b16 %v1888
        %v2019 = vunpack.c.l.b16 %v1889
        %v2020 = vunpack.c.l.b16 %v1890
        %v2021 = vunpack.c.l.b16 %v1891
        %v2022 = vunpack.c.l.b16 %v1892
        %v2023 = vpack.c.b16 %v1976, %v1975
        %v2024 = vpack.c.b16 %v1978, %v1977
        %v2025 = vpack.c.b16 %v1980, %v1979
        %v2026 = vpack.c.b16 %v1982, %v1981
        %v2027 = vpack.c.b16 %v1984, %v1983
        %v2028 = vpack.c.b16 %v1986, %v1985
        %v2029 = vpack.c.b16 %v1988, %v1987
        %v2030 = vpack.c.b16 %v1990, %v1989
        %v2031 = vpack.c.b16 %v1992, %v1991
        %v2032 = vpack.c.b16 %v1994, %v1993
        %v2033 = vpack.c.b16 %v1996, %v1995
        %v2034 = vpack.c.b16 %v1998, %v1997
        %v2035 = vpack.c.b16 %v2000, %v1999
        %v2036 = vpack.c.b16 %v2002, %v2001
        %v2037 = vpack.c.b16 %v2004, %v2003
        %v2038 = vpack.c.b16 %v2006, %v2005
        %v2039 = vpack.c.b16 %v2008, %v2007
        %v2040 = vpack.c.b16 %v2010, %v2009
        %v2041 = vpack.c.b16 %v2012, %v2011
        %v2042 = vpack.c.b16 %v2014, %v2013
        %v2043 = vpack.c.b16 %v2016, %v2015
        %v2044 = vpack.c.b16 %v2018, %v2017
        %v2045 = vpack.c.b16 %v2020, %v2019
        %v2046 = vpack.c.b16 %v2022, %v2021
        %2071 = vmatprep.subr.bf16.mxu0 0
        %2072 = vmatpush1.bf16.msra.mxu0 %v2030
        %2073 = vmatprep.subr.bf16.mxu0 0
        %2074 = vmatpush1.bf16.msra.mxu0 %v2029
        %2075 = vmatprep.subr.bf16.mxu0 0
        %2076 = vmatpush1.bf16.msra.mxu0 %v2028
        %2077 = vmatprep.subr.bf16.mxu0 0
        %2078 = vmatpush1.bf16.msra.mxu0 %v2027
        %2079 = vmatprep.subr.bf16.mxu0 0
        %2080 = vmatpush1.bf16.msra.mxu0 %v2026
        %2081 = vmatprep.subr.bf16.mxu0 0
        %2082 = vmatpush1.bf16.msra.mxu0 %v2025
        %2083 = vmatprep.subr.bf16.mxu0 0
        %2084 = vmatpush1.bf16.msra.mxu0 %v2024
        %2085 = vmatprep.subr.bf16.mxu0 0
        %2086 = vmatpush1.bf16.msra.mxu0 %v2023
        %2087 = vmatprep.subr.bf16.mxu0 0
        %2088 = vmatpush2.bf16.msra.mxu0 %v2038
        %2089 = vmatprep.subr.bf16.mxu0 0
        %2090 = vmatpush2.bf16.msra.mxu0 %v2037
        %2091 = vmatprep.subr.bf16.mxu0 0
        %2092 = vmatpush2.bf16.msra.mxu0 %v2036
        %2093 = vmatprep.subr.bf16.mxu0 0
        %2094 = vmatpush2.bf16.msra.mxu0 %v2035
        %2095 = vmatprep.subr.bf16.mxu0 0
        %2096 = vmatpush2.bf16.msra.mxu0 %v2034
        %2097 = vmatprep.subr.bf16.mxu0 0
        %2098 = vmatpush2.bf16.msra.mxu0 %v2033
        %2099 = vmatprep.subr.bf16.mxu0 0
        %2100 = vmatpush2.bf16.msra.mxu0 %v2032
        %2101 = vmatprep.subr.bf16.mxu0 0
        %2102 = vmatpush2.bf16.msra.mxu0 %v2031
        %2103 = vmatprep.mubr.bf16.mxu0 %v1922
        %2104 = vmatmul.mubr.bf16.gmra.mxu0 %v1915
        %v2105 = vpop.f32.mrf.mxu0
        %v2106 = vadd.f32 %v1898, %v2105
        %v2107 = vpop.f32.mrf.mxu0
        %v2108 = vpop.f32.mrf.mxu0
        %v2109 = vpop.f32.mrf.mxu0
        %2110 = vdwg.mxu0
        %2111 = vmatprep.subr.bf16.mxu0 0
        %2112 = vmatpush1.bf16.msra.mxu0 %v2046
        %2113 = vmatprep.subr.bf16.mxu0 0
        %2114 = vmatpush1.bf16.msra.mxu0 %v2045
        %2115 = vmatprep.subr.bf16.mxu0 0
        %2116 = vmatpush1.bf16.msra.mxu0 %v2044
        %2117 = vmatprep.subr.bf16.mxu0 0
        %2118 = vmatpush1.bf16.msra.mxu0 %v2043
        %2119 = vmatprep.subr.bf16.mxu0 0
        %2120 = vmatpush1.bf16.msra.mxu0 %v2042
        %2121 = vmatprep.subr.bf16.mxu0 0
        %2122 = vmatpush1.bf16.msra.mxu0 %v2041
        %2123 = vmatprep.subr.bf16.mxu0 0
        %2124 = vmatpush1.bf16.msra.mxu0 %v2040
        %2125 = vmatprep.subr.bf16.mxu0 0
        %2126 = vmatpush1.bf16.msra.mxu0 %v2039
        %2127 = vmatprep.subr.bf16.mxu0 0
        %2128 = vmatpush2.bf16.msra.mxu0 0
        %2129 = vmatprep.subr.bf16.mxu0 0
        %2130 = vmatpush2.bf16.msra.mxu0 0
        %2131 = vmatprep.subr.bf16.mxu0 0
        %2132 = vmatpush2.bf16.msra.mxu0 0
        %2133 = vmatprep.subr.bf16.mxu0 0
        %2134 = vmatpush2.bf16.msra.mxu0 0
        %2135 = vmatprep.subr.bf16.mxu0 0
        %2136 = vmatpush2.bf16.msra.mxu0 0
        %2137 = vmatprep.subr.bf16.mxu0 0
        %2138 = vmatpush2.bf16.msra.mxu0 0
        %2139 = vmatprep.subr.bf16.mxu0 0
        %2140 = vmatpush2.bf16.msra.mxu0 0
        %2141 = vmatprep.subr.bf16.mxu0 0
        %2142 = vmatpush2.bf16.msra.mxu0 0
        %2143 = vmatprep.mubr.bf16.mxu0 0
        %2144 = vmatmul.mubr.bf16.gmra.mxu0 %v1923
        %v2145 = vpop.f32.mrf.mxu0
        %v2146 = vadd.f32 %v2106, %v2145
        %v2147 = vpop.f32.mrf.mxu0
        %v2148 = vpop.f32.mrf.mxu0
        %v2149 = vpop.f32.mrf.mxu0
        %2150 = vdwg.mxu0
        %v2151 = vmax.f32 %v2146, 0.0
        %vm2152 = vcmask 189440
        %2153 = vst.msk [vmem:[%s543] sm:$0x3] %vm2152, %v2151
        %p2154 = scmp.lt.s32.totalorder %s30, 1
        %s2155 = scalar_select %p2154, %s30, 1
        %p2156 = scmp.lt.s32.totalorder %s31, 0
        %s2157 = scalar_select %p2156, %s31, 0
        %s2158 = sadd.s32 %s2157, %s2155
        %s2159 = smul.addr %s2158, 2
        %s2160 = scalar_lea.vmem %s9, %s2159
        // Predicated region
        $region69: #{encoder_cmc_forward.1} parent=55 // pred_check
          %p2161 = pneg %p292
        $region70: #{encoder_cmc_forward.1} parent=55 // pred_check_branch
          %2163 = sbr.rel (%p2161) target = $region72
        $region71: #{encoder_cmc_forward.1} parent=55 // pred_region
          _
        $region72: #{encoder_cmc_forward.1} parent=55 // pred_fallthru
          _
      $region56: #{encoder_cmc_forward.1} parent=5 // pred_fallthru
        _
      %p2164 = scmp.le.s32.totalorder 2, %s21
      // Predicated region
      $region73: #{encoder_cmc_forward.1} parent=5 // pred_check
        %p2165 = pneg %p2164
      $region74: #{encoder_cmc_forward.1} parent=5 // pred_check_branch
        %2167 = sbr.rel (%p2165) target = $region76
      $region75: #{encoder_cmc_forward.1} parent=5 // pred_region
        %s2168 = ssub.s32 %s21, 2
        // Predicated region
        $region77: #{encoder_cmc_forward.1} parent=75 // pred_check
          %p2169 = pneg %p298
        $region78: #{encoder_cmc_forward.1} parent=75 // pred_check_branch
          %2171 = sbr.rel (%p2169) target = $region80
        $region79: #{encoder_cmc_forward.1} parent=75 // pred_region
          %p2172 = scmp.lt.s32.totalorder %s32, 1
          %s2173 = scalar_select %p2172, %s32, 1
          %p2174 = scmp.lt.s32.totalorder %s33, 0
          %s2175 = scalar_select %p2174, %s33, 0
          %s2176 = sadd.s32 %s2175, %s2173
          %s2177 = smul.addr %s2176, 2
          %s2178 = scalar_lea.vmem %s9, %s2177
        $region80: #{encoder_cmc_forward.1} parent=75 // pred_fallthru
          _
      $region76: #{encoder_cmc_forward.1} parent=5 // pred_fallthru
        _
    $region6: #{encoder_cmc_forward.1} parent=1 // loop_footer
      %s25 = sadd.s32 1, %s21
    $region7: #{encoder_cmc_forward.1} parent=1 // loop_footer_branch
      %20 = sbr.rel target = $region3
    $region8: #{encoder_cmc_forward.1} parent=1 // loop_exit
      _
    %2179 = vsyncpa [#allocation10], 1
    %s2180 = scalar_lea.sflag [#allocation10], 1
    %2181 = vsyncpa %s2180, 1
    %2182 = vsyncpa [#allocation12], 1
    %s2183 = scalar_lea.sflag [#allocation12], 1
    %2184 = vsyncpa %s2183, 1

</llo_original>
